<compile_context>
chip_gen: v6e
topology: v6e:2x2x1
jax: 0.10.0
libtpu: 0.0.40
codegen_flags: <defaults>
</compile_context>

<pallas_src>
import functools

import jax
import jax.numpy as jnp
from jax.experimental import pallas as pl
from jax.experimental.pallas import tpu as pltpu

MAX_HOPS = 3

_TB_MAX = 1024   # review: raise block size cap (≈1.3 MiB f32 value block/step)
_MIN_GRID = 4    # review (v7x): >= 2 grid steps per TensorCore when possible


def _round_up(x, m):
    return (x + m - 1) // m * m


def _cdiv(a, b):
    return (a + b - 1) // b


def _choose_batch_tile(B8, batch_tile):
    """Balanced batch tiles: pick the tile count first, then split evenly."""
    if batch_tile is not None:
        TB = max(8, _round_up(int(batch_tile), 8))
    else:
        target = max(_cdiv(B8, _TB_MAX), min(_MIN_GRID, B8 // 8), 1)
        TB = max(8, _round_up(_cdiv(B8, target), 8))
        # If rounding TB up dropped the step count below target, split further
        # (guarantees >= _MIN_GRID steps whenever B8 allows it).
        while TB > 8 and _cdiv(B8, TB) < target:
            TB -= 8
    n_tiles = _cdiv(B8, TB)
    return TB, n_tiles


def _dmn_kernel(e1_ref, val_ref, mask_ref, wfused_ref, blin_ref, wattf_ref,
                batt_ref, out_ref, *, approx_recip: bool):
    """One batch tile of the DMN encoder forward.

    e1_ref    : (TB, D)     f32        initial memory u_0
    val_ref   : (TB, N, D)  f32/bf16   neighbor value embeddings
    mask_ref  : (TB, N, 1)  f32        neighbor mask (3-D layout, N on sublanes)
    wfused_ref: (D, 2D)     f32        [:, :D] = linfc weight^T, [:, D] = attfc
                                       u-columns, rest zero padding
    blin_ref  : (1, D)      f32        linfc bias
    wattf_ref : (1, D)      f32        attfc weight rows acting on `features`
    batt_ref  : (1,)        f32        attfc bias (SMEM scalar)
    out_ref   : (TB, D)     f32        final memory u_3
    """
    TB, N, D = val_ref.shape

    val = val_ref[...].astype(jnp.float32)               # (TB, N, D), f32 math
    mask3 = mask_ref[...]                                 # (TB, N, 1)
    u = e1_ref[...]                                       # (TB, D)
    w_fused = wfused_ref[...]                             # (D, 2D)
    b_att = batt_ref[0]                                   # scalar (SMEM)

    # Loop-invariant hoists (JAX does not CSE broadcast_in_dim).
    blin_b = jnp.broadcast_to(blin_ref[...], (TB, D))     # (TB, D)
    wf3 = wattf_ref[...].reshape(1, 1, D)                 # (1, 1, D)

    # features part of the attention logit, hoisted out of the 3-hop loop.
    # Exact identity: sum_d (val*mask)*w_f == mask * sum_d val*w_f, so
    # `features` is never materialized.  Stays in the 3-D (TB, N, 1) layout.
    att_f = mask3 * jnp.sum(val * wf3, axis=-1, keepdims=True)   # (TB, N, 1)

    for _ in range(MAX_HOPS):
        # Fused MXU matmul: cols [0:D) -> linfc pre-activation, col D -> att_u.
        y = jnp.dot(u, w_fused, preferred_element_type=jnp.float32)  # (TB, 2D)
        u_lin = jnp.maximum(y[:, :D] + blin_b, 0.0)                   # (TB, D)
        att_u = y[:, D:D + 1]                                         # (TB, 1)

        # att = relu(feat.w_f + u.w_u + b), kept 3-D (N on sublanes).
        att = jnp.maximum(att_f + att_u[:, :, None] + b_att, 0.0)     # (TB,N,1)

        # Masked softmax over neighbors, bit-for-bit the PyTorch version:
        # max over *all* neighbors, mask applied after exp, +1e-5 in denom.
        m = jnp.max(att, axis=1, keepdims=True)                       # (TB,1,1)
        e = jnp.exp(att - m) * mask3
        s = jnp.sum(e, axis=1, keepdims=True) + 1e-5
        if approx_recip:
            p = e * pl.reciprocal(s, approx=True)                     # EUP slot
        else:
            p = e / s                                                 # exact

        # o = sum_n features * p = sum_n val * (mask * p)   (exact identity:
        # features*p carries mask^2, and mask*p == mask^2*exp/s).
        o = jnp.sum(val * (mask3 * p), axis=1)                        # (TB, D)

        u = u_lin + o

    out_ref[...] = u


def dmn_encoder_forward(e1_embeded, rel_embeded, nei_embeded_key,
                        nei_embeded_value, nei_mask, dim,
                        w_lin, b_lin, w_att, b_att,
                        value_dtype=jnp.bfloat16, batch_tile=None,
                        approx_recip=False):
    """Pallas wrapper matching DMN_Encoder.forward semantics.

    rel_embeded / nei_embeded_key are accepted for signature fidelity but,
    exactly like the PyTorch forward, never used.

    value_dtype : storage dtype of the dominant (B, N, D) HBM stream.  Default
                  bfloat16 (halves HBM traffic; math stays f32 in-kernel).
                  Pass jnp.float32 for exact parity with the PyTorch module.
    approx_recip: use the EUP approximate reciprocal in the softmax denominator
                  (small numeric deviation from the PyTorch reference).
    """
    assert dim == 2, "forward only makes sense with dim=2 for (B, N, D) inputs"
    del rel_embeded, nei_embeded_key

    B, N, D = nei_embeded_value.shape

    # ---- balanced batch tiling -------------------------------------------
    B8 = _round_up(max(B, 1), 8)
    TB, n_tiles = _choose_batch_tile(B8, batch_tile)
    B_pad = TB * n_tiles
    grid = (n_tiles,)

    # ---- weights (PyTorch Linear is x @ W.T): pre-transpose / fuse on host -
    w_lin_t = jnp.asarray(w_lin, jnp.float32).T                   # (D, D)
    w_att32 = jnp.asarray(w_att, jnp.float32)                     # (1, 2D)
    w_att_f = w_att32[:, :D].reshape(1, D)                        # feat rows
    w_att_u_col = w_att32[:, D:].reshape(D, 1)                    # u rows -> col
    # fused (D, 2D): cols [0:D) = linfc^T, col D = attfc u-column, rest zeros.
    w_fused = jnp.concatenate(
        [w_lin_t, w_att_u_col, jnp.zeros((D, D - 1), jnp.float32)], axis=1)
    b_lin_r = jnp.asarray(b_lin, jnp.float32).reshape(1, D)
    b_att_r = jnp.asarray(b_att, jnp.float32).reshape(1,)         # SMEM scalar

    e1 = jnp.asarray(e1_embeded, jnp.float32)
    val = jnp.asarray(nei_embeded_value, value_dtype)
    msk3 = jnp.asarray(nei_mask, jnp.float32).reshape(B, N, 1)    # 3-D layout

    def pad_rows(x):
        pad = B_pad - x.shape[0]
        if pad == 0:
            return x
        return jnp.pad(x, ((0, pad),) + ((0, 0),) * (x.ndim - 1))

    e1_p, val_p, msk_p = pad_rows(e1), pad_rows(val), pad_rows(msk3)

    # ---- scoped-VMEM handling (only matters for user-forced large tiles) ---
    val_item = jnp.dtype(value_dtype).itemsize
    est_bytes = (2 * TB * N * D * val_item      # double-buffered value stream
                 + 2 * TB * N * D * 4           # f32 upcast + one product temp
                 + 8 * TB * D * 4               # u / u_lin / o / e1 / out tiles
                 + 8 * TB * N * 4               # attention (TB, N, 1) arrays
                 + (2 << 20))                   # weights + slack
    cp_kwargs = dict(dimension_semantics=("parallel",))
    if est_bytes > 12 * (1 << 20):              # above v5e's 16 MiB default
        cp_kwargs["vmem_limit_bytes"] = int(
            min(max(2 * est_bytes, 32 << 20), 100 << 20))
    compiler_params = pltpu.CompilerParams(**cp_kwargs)

    kernel = functools.partial(_dmn_kernel, approx_recip=bool(approx_recip))

    out = pl.pallas_call(
        kernel,
        out_shape=jax.ShapeDtypeStruct((B_pad, D), jnp.float32),
        grid=grid,
        in_specs=[
            pl.BlockSpec((TB, D), lambda b: (b, 0)),              # e1
            pl.BlockSpec((TB, N, D), lambda b: (b, 0, 0)),        # nei value
            pl.BlockSpec((TB, N, 1), lambda b: (b, 0, 0)),        # mask (3-D)
            pl.BlockSpec((D, 2 * D), lambda b: (0, 0)),           # fused weights
            pl.BlockSpec((1, D), lambda b: (0, 0)),               # b_lin
            pl.BlockSpec((1, D), lambda b: (0, 0)),               # w_att (feat)
            pl.BlockSpec(memory_space=pltpu.MemorySpace.SMEM),    # b_att scalar
        ],
        out_specs=pl.BlockSpec((TB, D), lambda b: (b, 0)),
        compiler_params=compiler_params,
    )(e1_p, val_p, msk_p, w_fused, b_lin_r, w_att_f, b_att_r)
    return out[:B]


def _reference_forward(e1, val, mask, w_lin, b_lin, w_att, b_att):
    """Pure-JAX reference mirroring the PyTorch code, for verification."""
    feat = val * mask[:, :, None]
    u = e1
    B, N, D = feat.shape
    for _ in range(MAX_HOPS):
        u_lin = jnp.maximum(u @ w_lin.T + b_lin, 0.0)
        m = jnp.concatenate(
            [feat, jnp.broadcast_to(u[:, None, :], feat.shape)], axis=2)
        att = jnp.maximum(m.reshape(-1, 2 * D) @ w_att.T + b_att, 0.0)
        att = att.reshape(B, N)
        mx = jnp.max(att, axis=1, keepdims=True)
        e = jnp.exp(att - mx) * mask
        p = e / (jnp.sum(e, axis=1, keepdims=True) + 1e-5)
        o = jnp.sum(feat * p[:, :, None], axis=1)
        u = u_lin + o
    return u


if __name__ == "__main__":
    # Full-precision f32 matmuls everywhere (kernel + reference) so the exact
    # test is meaningful; the only matmul in the kernel is a tiny (TB,32)x(32,64).
    jax.config.update("jax_default_matmul_precision", "highest")

    B, N, D = 2, 8, 32
    key = jax.random.PRNGKey(0)
    ks = jax.random.split(key, 8)

    e1_embeded = jax.random.normal(ks[0], (B, D), jnp.float32)
    rel_embeded = jax.random.normal(ks[1], (B, D), jnp.float32)         # unused
    nei_embeded_key = jax.random.normal(ks[2], (B, N, D), jnp.float32)  # unused
    nei_embeded_value = jax.random.normal(ks[3], (B, N, D), jnp.float32)
    nei_mask = (jax.random.uniform(ks[4], (B, N)) > 0.3).astype(jnp.float32)

    # deterministic parameter init (PyTorch Linear-style uniform bounds)
    lim_lin = 1.0 / jnp.sqrt(jnp.float32(D))
    w_lin = jax.random.uniform(ks[5], (D, D), jnp.float32, -lim_lin, lim_lin)
    b_lin = jax.random.uniform(ks[6], (D,), jnp.float32, -lim_lin, lim_lin)
    lim_att = 1.0 / jnp.sqrt(jnp.float32(2 * D))
    w_att = jax.random.uniform(ks[7], (1, 2 * D), jnp.float32, -lim_att, lim_att)
    b_att = jnp.zeros((1,), jnp.float32)

    ref = _reference_forward(e1_embeded, nei_embeded_value, nei_mask,
                             w_lin, b_lin, w_att, b_att)

    # 1) exact-semantics f32 path
    out = dmn_encoder_forward(e1_embeded, rel_embeded, nei_embeded_key,
                              nei_embeded_value, nei_mask, dim=2,
                              w_lin=w_lin, b_lin=b_lin, w_att=w_att, b_att=b_att,
                              value_dtype=jnp.float32)
    out = jax.block_until_ready(out)
    assert out.shape == (B, D)
    assert jnp.allclose(out, ref, atol=1e-4, rtol=1e-4), "f32 mismatch vs reference"

    # 2) shipped default: bf16 value stream (f32 math in-kernel)
    out_bf = dmn_encoder_forward(e1_embeded, rel_embeded, nei_embeded_key,
                                 nei_embeded_value, nei_mask, dim=2,
                                 w_lin=w_lin, b_lin=b_lin, w_att=w_att, b_att=b_att)
    out_bf = jax.block_until_ready(out_bf)
    val_q = nei_embeded_value.astype(jnp.bfloat16).astype(jnp.float32)
    ref_q = _reference_forward(e1_embeded, val_q, nei_mask,
                               w_lin, b_lin, w_att, b_att)
    assert jnp.allclose(out_bf, ref_q, atol=1e-3, rtol=1e-3), "bf16 mismatch vs reference"

    # 3) multi-tile grid + batch padding (B=20, batch_tile=8 -> grid=(3,), pad 24)
    B2 = 20
    k2 = jax.random.split(jax.random.PRNGKey(1), 3)
    e1_2 = jax.random.normal(k2[0], (B2, D), jnp.float32)
    val_2 = jax.random.normal(k2[1], (B2, N, D), jnp.float32)
    msk_2 = (jax.random.uniform(k2[2], (B2, N)) > 0.3).astype(jnp.float32)
    out2 = dmn_encoder_forward(e1_2, e1_2, val_2, val_2, msk_2, dim=2,
                               w_lin=w_lin, b_lin=b_lin, w_att=w_att, b_att=b_att,
                               value_dtype=jnp.float32, batch_tile=8)
    out2 = jax.block_until_ready(out2)
    ref2 = _reference_forward(e1_2, val_2, msk_2, w_lin, b_lin, w_att, b_att)
    assert out2.shape == (B2, D)
    assert jnp.allclose(out2, ref2, atol=1e-4, rtol=1e-4), "tiled-path mismatch"

    # 4) approx-reciprocal softmax knob (EUP fast path, small numeric deviation)
    out_ap = dmn_encoder_forward(e1_embeded, rel_embeded, nei_embeded_key,
                                 nei_embeded_value, nei_mask, dim=2,
                                 w_lin=w_lin, b_lin=b_lin, w_att=w_att, b_att=b_att,
                                 value_dtype=jnp.float32, approx_recip=True)
    out_ap = jax.block_until_ready(out_ap)
    assert jnp.allclose(out_ap, ref, atol=2e-2, rtol=2e-2), "approx-recip mismatch"

    print("KERNEL_OK")
</pallas_src>

<mosaic_0001>
module attributes {stable_mosaic.version = 11 : i64} {
  func.func @_dmn_kernel(%arg0: i32, %arg1: memref<8x32xf32, #tpu.memory_space<vmem>>, %arg2: memref<8x8x32xf32, #tpu.memory_space<vmem>>, %arg3: memref<8x8x1xf32, #tpu.memory_space<vmem>>, %arg4: memref<32x64xf32, #tpu.memory_space<vmem>>, %arg5: memref<1x32xf32, #tpu.memory_space<vmem>>, %arg6: memref<1x32xf32, #tpu.memory_space<vmem>>, %arg7: memref<1xf32, #tpu.memory_space<smem>>, %arg8: memref<8x32xf32, #tpu.memory_space<vmem>>) attributes {dimension_semantics = [#tpu.dimension_semantics<parallel>], iteration_bounds = array<i64: 1>, scalar_prefetch = 0 : i64, scratch_operands = 0 : i64, tpu.core_type = #tpu.core_type<tc>, window_params = [{transform_indices = @transform_0, window_bounds = array<i64: 8, 32>}, {transform_indices = @transform_1, window_bounds = array<i64: 8, 8, 32>}, {transform_indices = @transform_2, window_bounds = array<i64: 8, 8, 1>}, {pipeline_mode = #tpu.pipeline_mode<synchronous>, transform_indices = @transform_3, window_bounds = array<i64: 32, 64>}, {pipeline_mode = #tpu.pipeline_mode<synchronous>, transform_indices = @transform_4, window_bounds = array<i64: 1, 32>}, {pipeline_mode = #tpu.pipeline_mode<synchronous>, transform_indices = @transform_5, window_bounds = array<i64: 1, 32>}, {transform_indices = @transform_6, window_bounds = array<i64: 1>}, {transform_indices = @transform_7, window_bounds = array<i64: 8, 32>}]} {
    %c0 = arith.constant 0 : index
    %c0_0 = arith.constant 0 : index
    %c0_1 = arith.constant 0 : index
    %0 = vector.load %arg2[%c0, %c0_0, %c0_1] : memref<8x8x32xf32, #tpu.memory_space<vmem>>, vector<8x8x32xf32>
    %c0_2 = arith.constant 0 : index
    %c0_3 = arith.constant 0 : index
    %c0_4 = arith.constant 0 : index
    %1 = vector.load %arg3[%c0_2, %c0_3, %c0_4] : memref<8x8x1xf32, #tpu.memory_space<vmem>>, vector<8x8x1xf32>
    %c0_5 = arith.constant 0 : index
    %c0_6 = arith.constant 0 : index
    %2 = vector.load %arg1[%c0_5, %c0_6] : memref<8x32xf32, #tpu.memory_space<vmem>>, vector<8x32xf32>
    %c0_7 = arith.constant 0 : index
    %c0_8 = arith.constant 0 : index
    %3 = vector.load %arg4[%c0_7, %c0_8] : memref<32x64xf32, #tpu.memory_space<vmem>>, vector<32x64xf32>
    %c0_9 = arith.constant 0 : index
    %4 = memref.load %arg7[%c0_9] : memref<1xf32, #tpu.memory_space<smem>>
    %c0_10 = arith.constant 0 : index
    %c0_11 = arith.constant 0 : index
    %5 = vector.load %arg5[%c0_10, %c0_11] : memref<1x32xf32, #tpu.memory_space<vmem>>, vector<1x32xf32>
    %6 = vector.shape_cast %5 : vector<1x32xf32> to vector<1x32xf32>
    %7 = vector.broadcast %6 : vector<1x32xf32> to vector<8x32xf32>
    %c0_12 = arith.constant 0 : index
    %c0_13 = arith.constant 0 : index
    %8 = vector.load %arg6[%c0_12, %c0_13] : memref<1x32xf32, #tpu.memory_space<vmem>>, vector<1x32xf32>
    %9 = vector.shape_cast %8 : vector<1x32xf32> to vector<1x1x32xf32>
    %10 = vector.broadcast %9 : vector<1x1x32xf32> to vector<8x8x32xf32>
    %11 = arith.mulf %0, %10 : vector<8x8x32xf32>
    %cst = arith.constant dense<0.000000e+00> : vector<8x8xf32>
    %12 = vector.multi_reduction <add>, %11, %cst [2] : vector<8x8x32xf32> to vector<8x8xf32>
    %13 = vector.shape_cast %12 : vector<8x8xf32> to vector<8x8x1xf32>
    %14 = arith.mulf %1, %13 : vector<8x8x1xf32>
    %cst_14 = arith.constant dense<0.000000e+00> : vector<8x64xf32>
    %15 = tpu.matmul %2, %3, %cst_14 {dimension_numbers = #tpu.dot_dimension_numbers<[1], [0], [0], [1], [0, 0, 1, 1], [], []>, precision = #tpu.contract_precision<fp32>} : vector<8x32xf32>, vector<32x64xf32>, vector<8x64xf32> -> vector<8x64xf32>
    %16 = vector.extract_strided_slice %15 {offsets = [0, 0], sizes = [8, 32], strides = [1, 1]} : vector<8x64xf32> to vector<8x32xf32>
    %17 = arith.addf %16, %7 : vector<8x32xf32>
    %cst_15 = arith.constant 0.000000e+00 : f32
    %18 = vector.broadcast %cst_15 : f32 to vector<8x32xf32>
    %19 = arith.maximumf %17, %18 : vector<8x32xf32>
    %20 = vector.extract_strided_slice %15 {offsets = [0, 32], sizes = [8, 1], strides = [1, 1]} : vector<8x64xf32> to vector<8x1xf32>
    %21 = vector.shape_cast %20 : vector<8x1xf32> to vector<8x1x1xf32>
    %22 = vector.broadcast %21 : vector<8x1x1xf32> to vector<8x8x1xf32>
    %23 = arith.addf %14, %22 : vector<8x8x1xf32>
    %24 = vector.broadcast %4 : f32 to vector<8x8x1xf32>
    %25 = arith.addf %23, %24 : vector<8x8x1xf32>
    %cst_16 = arith.constant 0.000000e+00 : f32
    %26 = vector.broadcast %cst_16 : f32 to vector<8x8x1xf32>
    %27 = arith.maximumf %25, %26 : vector<8x8x1xf32>
    %cst_17 = arith.constant dense<0xFF800000> : vector<8x1xf32>
    %28 = vector.multi_reduction <maximumf>, %27, %cst_17 [1] : vector<8x8x1xf32> to vector<8x1xf32>
    %29 = vector.shape_cast %28 : vector<8x1xf32> to vector<8x1x1xf32>
    %30 = vector.broadcast %29 : vector<8x1x1xf32> to vector<8x8x1xf32>
    %31 = arith.subf %27, %30 : vector<8x8x1xf32>
    %32 = math.exp %31 : vector<8x8x1xf32>
    %33 = arith.mulf %32, %1 : vector<8x8x1xf32>
    %cst_18 = arith.constant dense<0.000000e+00> : vector<8x1xf32>
    %34 = vector.multi_reduction <add>, %33, %cst_18 [1] : vector<8x8x1xf32> to vector<8x1xf32>
    %35 = vector.shape_cast %34 : vector<8x1xf32> to vector<8x1x1xf32>
    %cst_19 = arith.constant 9.99999974E-6 : f32
    %36 = vector.broadcast %cst_19 : f32 to vector<8x1x1xf32>
    %37 = arith.addf %35, %36 : vector<8x1x1xf32>
    %38 = vector.broadcast %37 : vector<8x1x1xf32> to vector<8x8x1xf32>
    %39 = arith.divf %33, %38 : vector<8x8x1xf32>
    %40 = arith.mulf %1, %39 : vector<8x8x1xf32>
    %41 = vector.broadcast %40 : vector<8x8x1xf32> to vector<8x8x32xf32>
    %42 = arith.mulf %0, %41 : vector<8x8x32xf32>
    %cst_20 = arith.constant dense<0.000000e+00> : vector<8x32xf32>
    %43 = vector.multi_reduction <add>, %42, %cst_20 [1] : vector<8x8x32xf32> to vector<8x32xf32>
    %44 = arith.addf %19, %43 : vector<8x32xf32>
    %cst_21 = arith.constant dense<0.000000e+00> : vector<8x64xf32>
    %45 = tpu.matmul %44, %3, %cst_21 {dimension_numbers = #tpu.dot_dimension_numbers<[1], [0], [0], [1], [0, 0, 1, 1], [], []>, precision = #tpu.contract_precision<fp32>} : vector<8x32xf32>, vector<32x64xf32>, vector<8x64xf32> -> vector<8x64xf32>
    %46 = vector.extract_strided_slice %45 {offsets = [0, 0], sizes = [8, 32], strides = [1, 1]} : vector<8x64xf32> to vector<8x32xf32>
    %47 = arith.addf %46, %7 : vector<8x32xf32>
    %cst_22 = arith.constant 0.000000e+00 : f32
    %48 = vector.broadcast %cst_22 : f32 to vector<8x32xf32>
    %49 = arith.maximumf %47, %48 : vector<8x32xf32>
    %50 = vector.extract_strided_slice %45 {offsets = [0, 32], sizes = [8, 1], strides = [1, 1]} : vector<8x64xf32> to vector<8x1xf32>
    %51 = vector.shape_cast %50 : vector<8x1xf32> to vector<8x1x1xf32>
    %52 = vector.broadcast %51 : vector<8x1x1xf32> to vector<8x8x1xf32>
    %53 = arith.addf %14, %52 : vector<8x8x1xf32>
    %54 = vector.broadcast %4 : f32 to vector<8x8x1xf32>
    %55 = arith.addf %53, %54 : vector<8x8x1xf32>
    %cst_23 = arith.constant 0.000000e+00 : f32
    %56 = vector.broadcast %cst_23 : f32 to vector<8x8x1xf32>
    %57 = arith.maximumf %55, %56 : vector<8x8x1xf32>
    %cst_24 = arith.constant dense<0xFF800000> : vector<8x1xf32>
    %58 = vector.multi_reduction <maximumf>, %57, %cst_24 [1] : vector<8x8x1xf32> to vector<8x1xf32>
    %59 = vector.shape_cast %58 : vector<8x1xf32> to vector<8x1x1xf32>
    %60 = vector.broadcast %59 : vector<8x1x1xf32> to vector<8x8x1xf32>
    %61 = arith.subf %57, %60 : vector<8x8x1xf32>
    %62 = math.exp %61 : vector<8x8x1xf32>
    %63 = arith.mulf %62, %1 : vector<8x8x1xf32>
    %cst_25 = arith.constant dense<0.000000e+00> : vector<8x1xf32>
    %64 = vector.multi_reduction <add>, %63, %cst_25 [1] : vector<8x8x1xf32> to vector<8x1xf32>
    %65 = vector.shape_cast %64 : vector<8x1xf32> to vector<8x1x1xf32>
    %cst_26 = arith.constant 9.99999974E-6 : f32
    %66 = vector.broadcast %cst_26 : f32 to vector<8x1x1xf32>
    %67 = arith.addf %65, %66 : vector<8x1x1xf32>
    %68 = vector.broadcast %67 : vector<8x1x1xf32> to vector<8x8x1xf32>
    %69 = arith.divf %63, %68 : vector<8x8x1xf32>
    %70 = arith.mulf %1, %69 : vector<8x8x1xf32>
    %71 = vector.broadcast %70 : vector<8x8x1xf32> to vector<8x8x32xf32>
    %72 = arith.mulf %0, %71 : vector<8x8x32xf32>
    %cst_27 = arith.constant dense<0.000000e+00> : vector<8x32xf32>
    %73 = vector.multi_reduction <add>, %72, %cst_27 [1] : vector<8x8x32xf32> to vector<8x32xf32>
    %74 = arith.addf %49, %73 : vector<8x32xf32>
    %cst_28 = arith.constant dense<0.000000e+00> : vector<8x64xf32>
    %75 = tpu.matmul %74, %3, %cst_28 {dimension_numbers = #tpu.dot_dimension_numbers<[1], [0], [0], [1], [0, 0, 1, 1], [], []>, precision = #tpu.contract_precision<fp32>} : vector<8x32xf32>, vector<32x64xf32>, vector<8x64xf32> -> vector<8x64xf32>
    %76 = vector.extract_strided_slice %75 {offsets = [0, 0], sizes = [8, 32], strides = [1, 1]} : vector<8x64xf32> to vector<8x32xf32>
    %77 = arith.addf %76, %7 : vector<8x32xf32>
    %cst_29 = arith.constant 0.000000e+00 : f32
    %78 = vector.broadcast %cst_29 : f32 to vector<8x32xf32>
    %79 = arith.maximumf %77, %78 : vector<8x32xf32>
    %80 = vector.extract_strided_slice %75 {offsets = [0, 32], sizes = [8, 1], strides = [1, 1]} : vector<8x64xf32> to vector<8x1xf32>
    %81 = vector.shape_cast %80 : vector<8x1xf32> to vector<8x1x1xf32>
    %82 = vector.broadcast %81 : vector<8x1x1xf32> to vector<8x8x1xf32>
    %83 = arith.addf %14, %82 : vector<8x8x1xf32>
    %84 = vector.broadcast %4 : f32 to vector<8x8x1xf32>
    %85 = arith.addf %83, %84 : vector<8x8x1xf32>
    %cst_30 = arith.constant 0.000000e+00 : f32
    %86 = vector.broadcast %cst_30 : f32 to vector<8x8x1xf32>
    %87 = arith.maximumf %85, %86 : vector<8x8x1xf32>
    %cst_31 = arith.constant dense<0xFF800000> : vector<8x1xf32>
    %88 = vector.multi_reduction <maximumf>, %87, %cst_31 [1] : vector<8x8x1xf32> to vector<8x1xf32>
    %89 = vector.shape_cast %88 : vector<8x1xf32> to vector<8x1x1xf32>
    %90 = vector.broadcast %89 : vector<8x1x1xf32> to vector<8x8x1xf32>
    %91 = arith.subf %87, %90 : vector<8x8x1xf32>
    %92 = math.exp %91 : vector<8x8x1xf32>
    %93 = arith.mulf %92, %1 : vector<8x8x1xf32>
    %cst_32 = arith.constant dense<0.000000e+00> : vector<8x1xf32>
    %94 = vector.multi_reduction <add>, %93, %cst_32 [1] : vector<8x8x1xf32> to vector<8x1xf32>
    %95 = vector.shape_cast %94 : vector<8x1xf32> to vector<8x1x1xf32>
    %cst_33 = arith.constant 9.99999974E-6 : f32
    %96 = vector.broadcast %cst_33 : f32 to vector<8x1x1xf32>
    %97 = arith.addf %95, %96 : vector<8x1x1xf32>
    %98 = vector.broadcast %97 : vector<8x1x1xf32> to vector<8x8x1xf32>
    %99 = arith.divf %93, %98 : vector<8x8x1xf32>
    %100 = arith.mulf %1, %99 : vector<8x8x1xf32>
    %101 = vector.broadcast %100 : vector<8x8x1xf32> to vector<8x8x32xf32>
    %102 = arith.mulf %0, %101 : vector<8x8x32xf32>
    %cst_34 = arith.constant dense<0.000000e+00> : vector<8x32xf32>
    %103 = vector.multi_reduction <add>, %102, %cst_34 [1] : vector<8x8x32xf32> to vector<8x32xf32>
    %104 = arith.addf %79, %103 : vector<8x32xf32>
    %c0_35 = arith.constant 0 : index
    %c0_36 = arith.constant 0 : index
    %105 = vector.load %arg8[%c0_35, %c0_36] : memref<8x32xf32, #tpu.memory_space<vmem>>, vector<8x32xf32>
    tpu.vector_store %arg8[%c0_35, %c0_36], %104 {strides = array<i32>} : memref<8x32xf32, #tpu.memory_space<vmem>>, vector<8x32xf32>,
    return
  }
  func.func @transform_0(%arg0: i32) -> (i32, i32) {
    %c0_i32 = arith.constant 0 : i32
    %c0_i32_0 = arith.constant 0 : i32
    return %arg0, %c0_i32 : i32, i32
  }
  func.func @transform_1(%arg0: i32) -> (i32, i32, i32) {
    %c0_i32 = arith.constant 0 : i32
    %c0_i32_0 = arith.constant 0 : i32
    %c0_i32_1 = arith.constant 0 : i32
    return %arg0, %c0_i32, %c0_i32_0 : i32, i32, i32
  }
  func.func @transform_2(%arg0: i32) -> (i32, i32, i32) {
    %c0_i32 = arith.constant 0 : i32
    %c0_i32_0 = arith.constant 0 : i32
    %c0_i32_1 = arith.constant 0 : i32
    return %arg0, %c0_i32, %c0_i32_0 : i32, i32, i32
  }
  func.func @transform_3(%arg0: i32) -> (i32, i32) {
    %c0_i32 = arith.constant 0 : i32
    %c0_i32_0 = arith.constant 0 : i32
    %c0_i32_1 = arith.constant 0 : i32
    return %c0_i32, %c0_i32_0 : i32, i32
  }
  func.func @transform_4(%arg0: i32) -> (i32, i32) {
    %c0_i32 = arith.constant 0 : i32
    %c0_i32_0 = arith.constant 0 : i32
    %c0_i32_1 = arith.constant 0 : i32
    return %c0_i32, %c0_i32_0 : i32, i32
  }
  func.func @transform_5(%arg0: i32) -> (i32, i32) {
    %c0_i32 = arith.constant 0 : i32
    %c0_i32_0 = arith.constant 0 : i32
    %c0_i32_1 = arith.constant 0 : i32
    return %c0_i32, %c0_i32_0 : i32, i32
  }
  func.func @transform_6(%arg0: i32) -> i32 {
    %c0_i32 = arith.constant 0 : i32
    %c0_i32_0 = arith.constant 0 : i32
    return %c0_i32 : i32
  }
  func.func @transform_7(%arg0: i32) -> (i32, i32) {
    %c0_i32 = arith.constant 0 : i32
    %c0_i32_0 = arith.constant 0 : i32
    return %arg0, %c0_i32 : i32, i32
  }
}

</mosaic_0001>

<llo_original>
// kernel: tpu_custom_call.1
$region0: #{tpu_custom_call.1}
  #allocation0 [shape = 'u32[]', space=smem, size = 0x4, offset = 0x4, fixed_abs, tag = 'smem constant byte address 0x4 - core index']
  #allocation1 [shape = 'u32[144,128]{1,0:T(1,128)}', space=vmem, size = 0x12000, scoped, tag = 'internal scratch']
  #allocation2 [shape = 'f32[1]{0:T(128)S(6)}', space=smem, size = 0x200, scoped, tag = 'scoped memory for tpu_custom_call.1']
  %s0 = inlined_call_operand.vmem [shape: f32[8,32], index: 0, kind: input, shape index: {}]
  %s1 = inlined_call_operand.vmem [shape: f32[8,8,32], index: 1, kind: input, shape index: {}]
  %s2 = inlined_call_operand.vmem [shape: f32[8,8,1], index: 2, kind: input, shape index: {}]
  %s3 = inlined_call_operand.hbm [shape: f32[32,64], index: 3, kind: input, shape index: {}]
  %s4 = inlined_call_operand.vmem [shape: f32[1,32], index: 4, kind: input, shape index: {}]
  %s5 = inlined_call_operand.vmem [shape: f32[1,32], index: 5, kind: input, shape index: {}]
  %s6 = inlined_call_operand.<no memory space> [shape: f32[1], index: 6, kind: input, shape index: {}]
  %s7 = inlined_call_operand.hbm [shape: f32[8,32], index: 7, kind: output, shape index: {}]
  %s8 = sld [smem:[#allocation0]]
  $region42: #{tpu_custom_call.1} parent=0
    _
  %s10 = ssub.s32 1, %s8
  %s11 = scalar_select 0, %s10, %s8
  %12 = sst [smem:[#allocation2]] %s6
  $region1: #{tpu_custom_call.1} parent=0
    #allocation3 [shape = 'u8[16384]{0}', space=vmem, size = 0x4000, scoped, tag = 'input window, operand 3, single buffered']
    #allocation4 [shape = 's32[1]{0}', space=sflag, size = 0x4, scoped, tag = 'scoped memory for tpu_custom_call.1']
    #allocation5 [shape = 's32[1]{0}', space=sflag, size = 0x4, scoped, tag = 'scoped memory for tpu_custom_call.1']
    #allocation6 [shape = 'u8[4096]{0}', space=vmem, size = 0x1000, scoped, tag = 'output window, operand 0, single buffered']
    %13 = vsyncpa [#allocation4], 0
    %14 = vsyncpa [#allocation5], 0
    // Predicated region
    $region2: #{tpu_custom_call.1} parent=1 // pred_check
      _
    $region3: #{tpu_custom_call.1} parent=1 // pred_check_branch
      %16 = sbr.rel (0) target = $region5
    $region4: #{tpu_custom_call.1} parent=1 // pred_region
      _
    $region5: #{tpu_custom_call.1} parent=1 // pred_fallthru
      _
    // Predicated region
    $region6: #{tpu_custom_call.1} parent=1 // pred_check
      _
    $region7: #{tpu_custom_call.1} parent=1 // pred_check_branch
      %18 = sbr.rel (0) target = $region9
    $region8: #{tpu_custom_call.1} parent=1 // pred_region
      _
    $region9: #{tpu_custom_call.1} parent=1 // pred_fallthru
      _
    // Predicated region
    $region10: #{tpu_custom_call.1} parent=1 // pred_check
      _
    $region11: #{tpu_custom_call.1} parent=1 // pred_check_branch
      %20 = sbr.rel (0) target = $region13
    $region12: #{tpu_custom_call.1} parent=1 // pred_region
      _
    $region13: #{tpu_custom_call.1} parent=1 // pred_fallthru
      _
    // Predicated region
    $region14: #{tpu_custom_call.1} parent=1 // pred_check
      _
    $region15: #{tpu_custom_call.1} parent=1 // pred_check_branch
      %22 = sbr.rel (0) target = $region17
    $region16: #{tpu_custom_call.1} parent=1 // pred_region
      %s24 = ssub.s32 512, 512
      %25 = vsyncadd [#allocation4], %s24
      %s26 = sshll.u32 [#allocation3], 4
      %s27 = int_to_ptr.vmem [resolvable:$true] %s26
      %32 = dma.hbm_to_vmem [thread:$0]  %s3, 512, %s27, [#allocation4], 128, 128, 8
    $region17: #{tpu_custom_call.1} parent=1 // pred_fallthru
      _
    // Predicated region
    $region18: #{tpu_custom_call.1} parent=1 // pred_check
      _
    $region19: #{tpu_custom_call.1} parent=1 // pred_check_branch
      %34 = sbr.rel (0) target = $region21
    $region20: #{tpu_custom_call.1} parent=1 // pred_region
      _
    $region21: #{tpu_custom_call.1} parent=1 // pred_fallthru
      _
    // Predicated region
    $region22: #{tpu_custom_call.1} parent=1 // pred_check
      _
    $region23: #{tpu_custom_call.1} parent=1 // pred_check_branch
      %36 = sbr.rel (0) target = $region25
    $region24: #{tpu_custom_call.1} parent=1 // pred_region
      _
    $region25: #{tpu_custom_call.1} parent=1 // pred_fallthru
      _
    // Predicated region
    $region26: #{tpu_custom_call.1} parent=1 // pred_check
      _
    $region27: #{tpu_custom_call.1} parent=1 // pred_check_branch
      %38 = sbr.rel (0) target = $region29
    $region28: #{tpu_custom_call.1} parent=1 // pred_region
      _
    $region29: #{tpu_custom_call.1} parent=1 // pred_fallthru
      _
    // Predicated region
    $region30: #{tpu_custom_call.1} parent=1 // pred_check
      _
    $region31: #{tpu_custom_call.1} parent=1 // pred_check_branch
      %40 = sbr.rel (0) target = $region33
    $region32: #{tpu_custom_call.1} parent=1 // pred_region
      %41 = dma.done [#allocation4], 512
    $region33: #{tpu_custom_call.1} parent=1 // pred_fallthru
      _
    %v42 = vld [vmem:[%s1] sm:$0xff]
    %v43 = vld [vmem:[%s1 + $0x8] sm:$0xff]
    %v44 = vld [vmem:[%s1 + $0x10] sm:$0xff]
    %v45 = vld [vmem:[%s1 + $0x18] sm:$0xff]
    %v46 = vld [vmem:[%s1 + $0x20] sm:$0xff]
    %v47 = vld [vmem:[%s1 + $0x28] sm:$0xff]
    %v48 = vld [vmem:[%s1 + $0x30] sm:$0xff]
    %v49 = vld [vmem:[%s1 + $0x38] sm:$0xff]
    %v50 = vld [vmem:[%s2] sm:$0xff]
    %v51 = vld [vmem:[%s2 + $0x8] sm:$0xff]
    %v52 = vld [vmem:[%s2 + $0x10] sm:$0xff]
    %v53 = vld [vmem:[%s2 + $0x18] sm:$0xff]
    %v54 = vld [vmem:[%s2 + $0x20] sm:$0xff]
    %v55 = vld [vmem:[%s2 + $0x28] sm:$0xff]
    %v56 = vld [vmem:[%s2 + $0x30] sm:$0xff]
    %v57 = vld [vmem:[%s2 + $0x38] sm:$0xff]
    %v58 = vld [vmem:[%s0] sm:$0xff]
    %v59 = vld [vmem:[#allocation3] sm:$0xff]
    %v60 = vld [vmem:[#allocation3 + $0x8] sm:$0xff]
    %v61 = vld [vmem:[#allocation3 + $0x10] sm:$0xff]
    %v62 = vld [vmem:[#allocation3 + $0x18] sm:$0xff]
    %s63 = sld [smem:[#allocation2]]
    %v64 = vld [vmem:[%s4] sm:$0x1]
    %v66 = vlaneseq
    %v67 = vshrl.u32 %v66, 7
    %v68 = vsub.s32 0, %v67
    %v69 = vrot.slane %v64, %v68
    %v71 = vld [vmem:[%s5] sm:$0x1]
    %v73 = vlaneseq
    %v74 = vshrl.u32 %v73, 7
    %v75 = vsub.s32 0, %v74
    %v76 = vrot.slane %v71, %v75
    %v78 = vmul.f32 %v42, %v76
    %v79 = vmul.f32 %v43, %v76
    %v80 = vmul.f32 %v44, %v76
    %v81 = vmul.f32 %v45, %v76
    %v82 = vmul.f32 %v46, %v76
    %v83 = vmul.f32 %v47, %v76
    %v84 = vmul.f32 %v48, %v76
    %v85 = vmul.f32 %v49, %v76
    %vm86 = vcmask 261120
    %v87 = vsel %vm86, %v78, 0.0
    %88 = vadd.xlane.f32.xlu0 %v87
    %v89 = vpop.xlane.xlu0 %88
    %v90 = vsel %vm86, %v79, 0.0
    %91 = vadd.xlane.f32.xlu0 %v90
    %v92 = vpop.xlane.xlu0 %91
    %v93 = vsel %vm86, %v80, 0.0
    %94 = vadd.xlane.f32.xlu0 %v93
    %v95 = vpop.xlane.xlu0 %94
    %v96 = vsel %vm86, %v81, 0.0
    %97 = vadd.xlane.f32.xlu0 %v96
    %v98 = vpop.xlane.xlu0 %97
    %v99 = vsel %vm86, %v82, 0.0
    %100 = vadd.xlane.f32.xlu0 %v99
    %v101 = vpop.xlane.xlu0 %100
    %v102 = vsel %vm86, %v83, 0.0
    %103 = vadd.xlane.f32.xlu0 %v102
    %v104 = vpop.xlane.xlu0 %103
    %v105 = vsel %vm86, %v84, 0.0
    %106 = vadd.xlane.f32.xlu0 %v105
    %v107 = vpop.xlane.xlu0 %106
    %v108 = vsel %vm86, %v85, 0.0
    %109 = vadd.xlane.f32.xlu0 %v108
    %v110 = vpop.xlane.xlu0 %109
    %v111 = vmul.f32 %v50, %v89
    %v112 = vmul.f32 %v51, %v92
    %v113 = vmul.f32 %v52, %v95
    %v114 = vmul.f32 %v53, %v98
    %v115 = vmul.f32 %v54, %v101
    %v116 = vmul.f32 %v55, %v104
    %v117 = vmul.f32 %v56, %v107
    %v118 = vmul.f32 %v57, %v110
    %v120 = vsel %vm86, %v58, 0
    %122 = vmatprep.subr.mxu0 0.0
    %123 = vmatpush1.msra.mxu0 0.0
    %124 = vmatprep.subr.mxu0 0.0
    %125 = vmatpush1.msra.mxu0 0.0
    %126 = vmatprep.subr.mxu0 0.0
    %127 = vmatpush1.msra.mxu0 0.0
    %128 = vmatprep.subr.mxu0 0.0
    %129 = vmatpush1.msra.mxu0 0.0
    %130 = vmatprep.subr.mxu0 0.0
    %131 = vmatpush1.msra.mxu0 0.0
    %132 = vmatprep.subr.mxu0 0.0
    %133 = vmatpush1.msra.mxu0 0.0
    %134 = vmatprep.subr.mxu0 0.0
    %135 = vmatpush1.msra.mxu0 0.0
    %136 = vmatprep.subr.mxu0 0.0
    %137 = vmatpush1.msra.mxu0 0.0
    %138 = vmatprep.subr.mxu0 0.0
    %139 = vmatpush1.msra.mxu0 0.0
    %140 = vmatprep.subr.mxu0 0.0
    %141 = vmatpush1.msra.mxu0 0.0
    %142 = vmatprep.subr.mxu0 0.0
    %143 = vmatpush1.msra.mxu0 0.0
    %144 = vmatprep.subr.mxu0 0.0
    %145 = vmatpush1.msra.mxu0 0.0
    %146 = vmatprep.subr.mxu0 0.0
    %v147 = vand.u32 %v62, 4294901760
    %148 = vmatpush1.msra.mxu0 %v147
    %149 = vmatprep.subr.mxu0 0.0
    %v150 = vand.u32 %v61, 4294901760
    %151 = vmatpush1.msra.mxu0 %v150
    %152 = vmatprep.subr.mxu0 0.0
    %v153 = vand.u32 %v60, 4294901760
    %154 = vmatpush1.msra.mxu0 %v153
    %155 = vmatprep.subr.mxu0 0.0
    %v156 = vand.u32 %v59, 4294901760
    %157 = vmatpush1.msra.mxu0 %v156
    %158 = vmatprep.subr.mxu0 0.0
    %159 = vmatpush2.msra.mxu0 0.0
    %160 = vmatprep.subr.mxu0 0.0
    %161 = vmatpush2.msra.mxu0 0.0
    %162 = vmatprep.subr.mxu0 0.0
    %163 = vmatpush2.msra.mxu0 0.0
    %164 = vmatprep.subr.mxu0 0.0
    %165 = vmatpush2.msra.mxu0 0.0
    %166 = vmatprep.subr.mxu0 0.0
    %167 = vmatpush2.msra.mxu0 0.0
    %168 = vmatprep.subr.mxu0 0.0
    %169 = vmatpush2.msra.mxu0 0.0
    %170 = vmatprep.subr.mxu0 0.0
    %171 = vmatpush2.msra.mxu0 0.0
    %172 = vmatprep.subr.mxu0 0.0
    %173 = vmatpush2.msra.mxu0 0.0
    %174 = vmatprep.subr.mxu0 0.0
    %175 = vmatpush2.msra.mxu0 0.0
    %176 = vmatprep.subr.mxu0 0.0
    %177 = vmatpush2.msra.mxu0 0.0
    %178 = vmatprep.subr.mxu0 0.0
    %179 = vmatpush2.msra.mxu0 0.0
    %180 = vmatprep.subr.mxu0 0.0
    %181 = vmatpush2.msra.mxu0 0.0
    %182 = vmatprep.subr.mxu0 0.0
    %183 = vmatpush2.msra.mxu0 0.0
    %184 = vmatprep.subr.mxu0 0.0
    %185 = vmatpush2.msra.mxu0 0.0
    %186 = vmatprep.subr.mxu0 0.0
    %187 = vmatpush2.msra.mxu0 0.0
    %188 = vmatprep.subr.mxu0 0.0
    %189 = vmatpush2.msra.mxu0 0.0
    %190 = vmatprep.mubr.f32.mxu0 0.0
    %v191 = vand.u32 %v120, 4294901760
    %v192 = vsub.f32 %v120, %v191
    %v193 = vand.u32 %v192, 4294901760
    %v194 = vsub.f32 %v192, %v193
    %v195 = vand.u32 %v194, 4294901760
    %196 = vmatmul.mubr.f32.gmra.mxu0 %v195
    %v197 = vpop.f32.mrf.mxu0
    %v198 = vadd.f32 0.0, %v197
    %v199 = vpop.f32.mrf.mxu0
    %200 = vdwg.mxu0
    %201 = vmatprep.subr.mxu0 0.0
    %202 = vmatpush1.msra.mxu0 0.0
    %203 = vmatprep.subr.mxu0 0.0
    %204 = vmatpush1.msra.mxu0 0.0
    %205 = vmatprep.subr.mxu0 0.0
    %206 = vmatpush1.msra.mxu0 0.0
    %207 = vmatprep.subr.mxu0 0.0
    %208 = vmatpush1.msra.mxu0 0.0
    %209 = vmatprep.subr.mxu0 0.0
    %210 = vmatpush1.msra.mxu0 0.0
    %211 = vmatprep.subr.mxu0 0.0
    %212 = vmatpush1.msra.mxu0 0.0
    %213 = vmatprep.subr.mxu0 0.0
    %214 = vmatpush1.msra.mxu0 0.0
    %215 = vmatprep.subr.mxu0 0.0
    %216 = vmatpush1.msra.mxu0 0.0
    %217 = vmatprep.subr.mxu0 0.0
    %218 = vmatpush1.msra.mxu0 0.0
    %219 = vmatprep.subr.mxu0 0.0
    %220 = vmatpush1.msra.mxu0 0.0
    %221 = vmatprep.subr.mxu0 0.0
    %222 = vmatpush1.msra.mxu0 0.0
    %223 = vmatprep.subr.mxu0 0.0
    %224 = vmatpush1.msra.mxu0 0.0
    %225 = vmatprep.subr.mxu0 0.0
    %v226 = vand.u32 %v62, 4294901760
    %v227 = vsub.f32 %v62, %v226
    %v228 = vand.u32 %v227, 4294901760
    %v229 = vsub.f32 %v227, %v228
    %v230 = vand.u32 %v229, 4294901760
    %231 = vmatpush1.msra.mxu0 %v230
    %232 = vmatprep.subr.mxu0 0.0
    %v233 = vand.u32 %v61, 4294901760
    %v234 = vsub.f32 %v61, %v233
    %v235 = vand.u32 %v234, 4294901760
    %v236 = vsub.f32 %v234, %v235
    %v237 = vand.u32 %v236, 4294901760
    %238 = vmatpush1.msra.mxu0 %v237
    %239 = vmatprep.subr.mxu0 0.0
    %v240 = vand.u32 %v60, 4294901760
    %v241 = vsub.f32 %v60, %v240
    %v242 = vand.u32 %v241, 4294901760
    %v243 = vsub.f32 %v241, %v242
    %v244 = vand.u32 %v243, 4294901760
    %245 = vmatpush1.msra.mxu0 %v244
    %246 = vmatprep.subr.mxu0 0.0
    %v247 = vand.u32 %v59, 4294901760
    %v248 = vsub.f32 %v59, %v247
    %v249 = vand.u32 %v248, 4294901760
    %v250 = vsub.f32 %v248, %v249
    %v251 = vand.u32 %v250, 4294901760
    %252 = vmatpush1.msra.mxu0 %v251
    %253 = vmatprep.subr.mxu0 0.0
    %254 = vmatpush2.msra.mxu0 0.0
    %255 = vmatprep.subr.mxu0 0.0
    %256 = vmatpush2.msra.mxu0 0.0
    %257 = vmatprep.subr.mxu0 0.0
    %258 = vmatpush2.msra.mxu0 0.0
    %259 = vmatprep.subr.mxu0 0.0
    %260 = vmatpush2.msra.mxu0 0.0
    %261 = vmatprep.subr.mxu0 0.0
    %262 = vmatpush2.msra.mxu0 0.0
    %263 = vmatprep.subr.mxu0 0.0
    %264 = vmatpush2.msra.mxu0 0.0
    %265 = vmatprep.subr.mxu0 0.0
    %266 = vmatpush2.msra.mxu0 0.0
    %267 = vmatprep.subr.mxu0 0.0
    %268 = vmatpush2.msra.mxu0 0.0
    %269 = vmatprep.subr.mxu0 0.0
    %270 = vmatpush2.msra.mxu0 0.0
    %271 = vmatprep.subr.mxu0 0.0
    %272 = vmatpush2.msra.mxu0 0.0
    %273 = vmatprep.subr.mxu0 0.0
    %274 = vmatpush2.msra.mxu0 0.0
    %275 = vmatprep.subr.mxu0 0.0
    %276 = vmatpush2.msra.mxu0 0.0
    %277 = vmatprep.subr.mxu0 0.0
    %278 = vmatpush2.msra.mxu0 0.0
    %279 = vmatprep.subr.mxu0 0.0
    %280 = vmatpush2.msra.mxu0 0.0
    %281 = vmatprep.subr.mxu0 0.0
    %282 = vmatpush2.msra.mxu0 0.0
    %283 = vmatprep.subr.mxu0 0.0
    %284 = vmatpush2.msra.mxu0 0.0
    %285 = vmatprep.mubr.f32.mxu0 0.0
    %v286 = vand.u32 %v120, 4294901760
    %287 = vmatmul.mubr.f32.gmra.mxu0 %v286
    %v288 = vpop.f32.mrf.mxu0
    %v289 = vadd.f32 %v198, %v288
    %v290 = vpop.f32.mrf.mxu0
    %291 = vdwg.mxu0
    %292 = vmatprep.subr.mxu0 0.0
    %293 = vmatpush1.msra.mxu0 0.0
    %294 = vmatprep.subr.mxu0 0.0
    %295 = vmatpush1.msra.mxu0 0.0
    %296 = vmatprep.subr.mxu0 0.0
    %297 = vmatpush1.msra.mxu0 0.0
    %298 = vmatprep.subr.mxu0 0.0
    %299 = vmatpush1.msra.mxu0 0.0
    %300 = vmatprep.subr.mxu0 0.0
    %301 = vmatpush1.msra.mxu0 0.0
    %302 = vmatprep.subr.mxu0 0.0
    %303 = vmatpush1.msra.mxu0 0.0
    %304 = vmatprep.subr.mxu0 0.0
    %305 = vmatpush1.msra.mxu0 0.0
    %306 = vmatprep.subr.mxu0 0.0
    %307 = vmatpush1.msra.mxu0 0.0
    %308 = vmatprep.subr.mxu0 0.0
    %309 = vmatpush1.msra.mxu0 0.0
    %310 = vmatprep.subr.mxu0 0.0
    %311 = vmatpush1.msra.mxu0 0.0
    %312 = vmatprep.subr.mxu0 0.0
    %313 = vmatpush1.msra.mxu0 0.0
    %314 = vmatprep.subr.mxu0 0.0
    %315 = vmatpush1.msra.mxu0 0.0
    %316 = vmatprep.subr.mxu0 0.0
    %v317 = vand.u32 %v62, 4294901760
    %v318 = vsub.f32 %v62, %v317
    %319 = vmatpush1.msra.mxu0 %v318
    %320 = vmatprep.subr.mxu0 0.0
    %v321 = vand.u32 %v61, 4294901760
    %v322 = vsub.f32 %v61, %v321
    %323 = vmatpush1.msra.mxu0 %v322
    %324 = vmatprep.subr.mxu0 0.0
    %v325 = vand.u32 %v60, 4294901760
    %v326 = vsub.f32 %v60, %v325
    %327 = vmatpush1.msra.mxu0 %v326
    %328 = vmatprep.subr.mxu0 0.0
    %v329 = vand.u32 %v59, 4294901760
    %v330 = vsub.f32 %v59, %v329
    %331 = vmatpush1.msra.mxu0 %v330
    %332 = vmatprep.subr.mxu0 0.0
    %333 = vmatpush2.msra.mxu0 0.0
    %334 = vmatprep.subr.mxu0 0.0
    %335 = vmatpush2.msra.mxu0 0.0
    %336 = vmatprep.subr.mxu0 0.0
    %337 = vmatpush2.msra.mxu0 0.0
    %338 = vmatprep.subr.mxu0 0.0
    %339 = vmatpush2.msra.mxu0 0.0
    %340 = vmatprep.subr.mxu0 0.0
    %341 = vmatpush2.msra.mxu0 0.0
    %342 = vmatprep.subr.mxu0 0.0
    %343 = vmatpush2.msra.mxu0 0.0
    %344 = vmatprep.subr.mxu0 0.0
    %345 = vmatpush2.msra.mxu0 0.0
    %346 = vmatprep.subr.mxu0 0.0
    %347 = vmatpush2.msra.mxu0 0.0
    %348 = vmatprep.subr.mxu0 0.0
    %349 = vmatpush2.msra.mxu0 0.0
    %350 = vmatprep.subr.mxu0 0.0
    %351 = vmatpush2.msra.mxu0 0.0
    %352 = vmatprep.subr.mxu0 0.0
    %353 = vmatpush2.msra.mxu0 0.0
    %354 = vmatprep.subr.mxu0 0.0
    %355 = vmatpush2.msra.mxu0 0.0
    %356 = vmatprep.subr.mxu0 0.0
    %357 = vmatpush2.msra.mxu0 0.0
    %358 = vmatprep.subr.mxu0 0.0
    %359 = vmatpush2.msra.mxu0 0.0
    %360 = vmatprep.subr.mxu0 0.0
    %361 = vmatpush2.msra.mxu0 0.0
    %362 = vmatprep.subr.mxu0 0.0
    %363 = vmatpush2.msra.mxu0 0.0
    %364 = vmatprep.mubr.f32.mxu0 0.0
    %v365 = vand.u32 %v120, 4294901760
    %v366 = vsub.f32 %v120, %v365
    %367 = vmatmul.mubr.f32.gmra.mxu0 %v366
    %v368 = vpop.f32.mrf.mxu0
    %v369 = vadd.f32 %v289, %v368
    %v370 = vpop.f32.mrf.mxu0
    %371 = vdwg.mxu0
    %372 = vmatprep.subr.mxu0 0.0
    %373 = vmatpush1.msra.mxu0 0.0
    %374 = vmatprep.subr.mxu0 0.0
    %375 = vmatpush1.msra.mxu0 0.0
    %376 = vmatprep.subr.mxu0 0.0
    %377 = vmatpush1.msra.mxu0 0.0
    %378 = vmatprep.subr.mxu0 0.0
    %379 = vmatpush1.msra.mxu0 0.0
    %380 = vmatprep.subr.mxu0 0.0
    %381 = vmatpush1.msra.mxu0 0.0
    %382 = vmatprep.subr.mxu0 0.0
    %383 = vmatpush1.msra.mxu0 0.0
    %384 = vmatprep.subr.mxu0 0.0
    %385 = vmatpush1.msra.mxu0 0.0
    %386 = vmatprep.subr.mxu0 0.0
    %387 = vmatpush1.msra.mxu0 0.0
    %388 = vmatprep.subr.mxu0 0.0
    %389 = vmatpush1.msra.mxu0 0.0
    %390 = vmatprep.subr.mxu0 0.0
    %391 = vmatpush1.msra.mxu0 0.0
    %392 = vmatprep.subr.mxu0 0.0
    %393 = vmatpush1.msra.mxu0 0.0
    %394 = vmatprep.subr.mxu0 0.0
    %395 = vmatpush1.msra.mxu0 0.0
    %396 = vmatprep.subr.mxu0 0.0
    %v397 = vand.u32 %v62, 4294901760
    %398 = vmatpush1.msra.mxu0 %v397
    %399 = vmatprep.subr.mxu0 0.0
    %v400 = vand.u32 %v61, 4294901760
    %401 = vmatpush1.msra.mxu0 %v400
    %402 = vmatprep.subr.mxu0 0.0
    %v403 = vand.u32 %v60, 4294901760
    %404 = vmatpush1.msra.mxu0 %v403
    %405 = vmatprep.subr.mxu0 0.0
    %v406 = vand.u32 %v59, 4294901760
    %407 = vmatpush1.msra.mxu0 %v406
    %408 = vmatprep.subr.mxu0 0.0
    %409 = vmatpush2.msra.mxu0 0.0
    %410 = vmatprep.subr.mxu0 0.0
    %411 = vmatpush2.msra.mxu0 0.0
    %412 = vmatprep.subr.mxu0 0.0
    %413 = vmatpush2.msra.mxu0 0.0
    %414 = vmatprep.subr.mxu0 0.0
    %415 = vmatpush2.msra.mxu0 0.0
    %416 = vmatprep.subr.mxu0 0.0
    %417 = vmatpush2.msra.mxu0 0.0
    %418 = vmatprep.subr.mxu0 0.0
    %419 = vmatpush2.msra.mxu0 0.0
    %420 = vmatprep.subr.mxu0 0.0
    %421 = vmatpush2.msra.mxu0 0.0
    %422 = vmatprep.subr.mxu0 0.0
    %423 = vmatpush2.msra.mxu0 0.0
    %424 = vmatprep.subr.mxu0 0.0
    %425 = vmatpush2.msra.mxu0 0.0
    %426 = vmatprep.subr.mxu0 0.0
    %427 = vmatpush2.msra.mxu0 0.0
    %428 = vmatprep.subr.mxu0 0.0
    %429 = vmatpush2.msra.mxu0 0.0
    %430 = vmatprep.subr.mxu0 0.0
    %431 = vmatpush2.msra.mxu0 0.0
    %432 = vmatprep.subr.mxu0 0.0
    %433 = vmatpush2.msra.mxu0 0.0
    %434 = vmatprep.subr.mxu0 0.0
    %435 = vmatpush2.msra.mxu0 0.0
    %436 = vmatprep.subr.mxu0 0.0
    %437 = vmatpush2.msra.mxu0 0.0
    %438 = vmatprep.subr.mxu0 0.0
    %439 = vmatpush2.msra.mxu0 0.0
    %440 = vmatprep.mubr.f32.mxu0 0.0
    %v441 = vand.u32 %v120, 4294901760
    %v442 = vsub.f32 %v120, %v441
    %v443 = vand.u32 %v442, 4294901760
    %444 = vmatmul.mubr.f32.gmra.mxu0 %v443
    %v445 = vpop.f32.mrf.mxu0
    %v446 = vadd.f32 %v369, %v445
    %v447 = vpop.f32.mrf.mxu0
    %448 = vdwg.mxu0
    %449 = vmatprep.subr.mxu0 0.0
    %450 = vmatpush1.msra.mxu0 0.0
    %451 = vmatprep.subr.mxu0 0.0
    %452 = vmatpush1.msra.mxu0 0.0
    %453 = vmatprep.subr.mxu0 0.0
    %454 = vmatpush1.msra.mxu0 0.0
    %455 = vmatprep.subr.mxu0 0.0
    %456 = vmatpush1.msra.mxu0 0.0
    %457 = vmatprep.subr.mxu0 0.0
    %458 = vmatpush1.msra.mxu0 0.0
    %459 = vmatprep.subr.mxu0 0.0
    %460 = vmatpush1.msra.mxu0 0.0
    %461 = vmatprep.subr.mxu0 0.0
    %462 = vmatpush1.msra.mxu0 0.0
    %463 = vmatprep.subr.mxu0 0.0
    %464 = vmatpush1.msra.mxu0 0.0
    %465 = vmatprep.subr.mxu0 0.0
    %466 = vmatpush1.msra.mxu0 0.0
    %467 = vmatprep.subr.mxu0 0.0
    %468 = vmatpush1.msra.mxu0 0.0
    %469 = vmatprep.subr.mxu0 0.0
    %470 = vmatpush1.msra.mxu0 0.0
    %471 = vmatprep.subr.mxu0 0.0
    %472 = vmatpush1.msra.mxu0 0.0
    %473 = vmatprep.subr.mxu0 0.0
    %v474 = vand.u32 %v62, 4294901760
    %v475 = vsub.f32 %v62, %v474
    %v476 = vand.u32 %v475, 4294901760
    %477 = vmatpush1.msra.mxu0 %v476
    %478 = vmatprep.subr.mxu0 0.0
    %v479 = vand.u32 %v61, 4294901760
    %v480 = vsub.f32 %v61, %v479
    %v481 = vand.u32 %v480, 4294901760
    %482 = vmatpush1.msra.mxu0 %v481
    %483 = vmatprep.subr.mxu0 0.0
    %v484 = vand.u32 %v60, 4294901760
    %v485 = vsub.f32 %v60, %v484
    %v486 = vand.u32 %v485, 4294901760
    %487 = vmatpush1.msra.mxu0 %v486
    %488 = vmatprep.subr.mxu0 0.0
    %v489 = vand.u32 %v59, 4294901760
    %v490 = vsub.f32 %v59, %v489
    %v491 = vand.u32 %v490, 4294901760
    %492 = vmatpush1.msra.mxu0 %v491
    %493 = vmatprep.subr.mxu0 0.0
    %494 = vmatpush2.msra.mxu0 0.0
    %495 = vmatprep.subr.mxu0 0.0
    %496 = vmatpush2.msra.mxu0 0.0
    %497 = vmatprep.subr.mxu0 0.0
    %498 = vmatpush2.msra.mxu0 0.0
    %499 = vmatprep.subr.mxu0 0.0
    %500 = vmatpush2.msra.mxu0 0.0
    %501 = vmatprep.subr.mxu0 0.0
    %502 = vmatpush2.msra.mxu0 0.0
    %503 = vmatprep.subr.mxu0 0.0
    %504 = vmatpush2.msra.mxu0 0.0
    %505 = vmatprep.subr.mxu0 0.0
    %506 = vmatpush2.msra.mxu0 0.0
    %507 = vmatprep.subr.mxu0 0.0
    %508 = vmatpush2.msra.mxu0 0.0
    %509 = vmatprep.subr.mxu0 0.0
    %510 = vmatpush2.msra.mxu0 0.0
    %511 = vmatprep.subr.mxu0 0.0
    %512 = vmatpush2.msra.mxu0 0.0
    %513 = vmatprep.subr.mxu0 0.0
    %514 = vmatpush2.msra.mxu0 0.0
    %515 = vmatprep.subr.mxu0 0.0
    %516 = vmatpush2.msra.mxu0 0.0
    %517 = vmatprep.subr.mxu0 0.0
    %518 = vmatpush2.msra.mxu0 0.0
    %519 = vmatprep.subr.mxu0 0.0
    %520 = vmatpush2.msra.mxu0 0.0
    %521 = vmatprep.subr.mxu0 0.0
    %522 = vmatpush2.msra.mxu0 0.0
    %523 = vmatprep.subr.mxu0 0.0
    %524 = vmatpush2.msra.mxu0 0.0
    %525 = vmatprep.mubr.f32.mxu0 0.0
    %v526 = vand.u32 %v120, 4294901760
    %527 = vmatmul.mubr.f32.gmra.mxu0 %v526
    %v528 = vpop.f32.mrf.mxu0
    %v529 = vadd.f32 %v446, %v528
    %v530 = vpop.f32.mrf.mxu0
    %531 = vdwg.mxu0
    %532 = vmatprep.subr.mxu0 0.0
    %533 = vmatpush1.msra.mxu0 0.0
    %534 = vmatprep.subr.mxu0 0.0
    %535 = vmatpush1.msra.mxu0 0.0
    %536 = vmatprep.subr.mxu0 0.0
    %537 = vmatpush1.msra.mxu0 0.0
    %538 = vmatprep.subr.mxu0 0.0
    %539 = vmatpush1.msra.mxu0 0.0
    %540 = vmatprep.subr.mxu0 0.0
    %541 = vmatpush1.msra.mxu0 0.0
    %542 = vmatprep.subr.mxu0 0.0
    %543 = vmatpush1.msra.mxu0 0.0
    %544 = vmatprep.subr.mxu0 0.0
    %545 = vmatpush1.msra.mxu0 0.0
    %546 = vmatprep.subr.mxu0 0.0
    %547 = vmatpush1.msra.mxu0 0.0
    %548 = vmatprep.subr.mxu0 0.0
    %549 = vmatpush1.msra.mxu0 0.0
    %550 = vmatprep.subr.mxu0 0.0
    %551 = vmatpush1.msra.mxu0 0.0
    %552 = vmatprep.subr.mxu0 0.0
    %553 = vmatpush1.msra.mxu0 0.0
    %554 = vmatprep.subr.mxu0 0.0
    %555 = vmatpush1.msra.mxu0 0.0
    %556 = vmatprep.subr.mxu0 0.0
    %v557 = vand.u32 %v62, 4294901760
    %558 = vmatpush1.msra.mxu0 %v557
    %559 = vmatprep.subr.mxu0 0.0
    %v560 = vand.u32 %v61, 4294901760
    %561 = vmatpush1.msra.mxu0 %v560
    %562 = vmatprep.subr.mxu0 0.0
    %v563 = vand.u32 %v60, 4294901760
    %564 = vmatpush1.msra.mxu0 %v563
    %565 = vmatprep.subr.mxu0 0.0
    %v566 = vand.u32 %v59, 4294901760
    %567 = vmatpush1.msra.mxu0 %v566
    %568 = vmatprep.subr.mxu0 0.0
    %569 = vmatpush2.msra.mxu0 0.0
    %570 = vmatprep.subr.mxu0 0.0
    %571 = vmatpush2.msra.mxu0 0.0
    %572 = vmatprep.subr.mxu0 0.0
    %573 = vmatpush2.msra.mxu0 0.0
    %574 = vmatprep.subr.mxu0 0.0
    %575 = vmatpush2.msra.mxu0 0.0
    %576 = vmatprep.subr.mxu0 0.0
    %577 = vmatpush2.msra.mxu0 0.0
    %578 = vmatprep.subr.mxu0 0.0
    %579 = vmatpush2.msra.mxu0 0.0
    %580 = vmatprep.subr.mxu0 0.0
    %581 = vmatpush2.msra.mxu0 0.0
    %582 = vmatprep.subr.mxu0 0.0
    %583 = vmatpush2.msra.mxu0 0.0
    %584 = vmatprep.subr.mxu0 0.0
    %585 = vmatpush2.msra.mxu0 0.0
    %586 = vmatprep.subr.mxu0 0.0
    %587 = vmatpush2.msra.mxu0 0.0
    %588 = vmatprep.subr.mxu0 0.0
    %589 = vmatpush2.msra.mxu0 0.0
    %590 = vmatprep.subr.mxu0 0.0
    %591 = vmatpush2.msra.mxu0 0.0
    %592 = vmatprep.subr.mxu0 0.0
    %593 = vmatpush2.msra.mxu0 0.0
    %594 = vmatprep.subr.mxu0 0.0
    %595 = vmatpush2.msra.mxu0 0.0
    %596 = vmatprep.subr.mxu0 0.0
    %597 = vmatpush2.msra.mxu0 0.0
    %598 = vmatprep.subr.mxu0 0.0
    %599 = vmatpush2.msra.mxu0 0.0
    %600 = vmatprep.mubr.f32.mxu0 0.0
    %v601 = vand.u32 %v120, 4294901760
    %602 = vmatmul.mubr.f32.gmra.mxu0 %v601
    %v603 = vpop.f32.mrf.mxu0
    %v604 = vadd.f32 %v529, %v603
    %v605 = vpop.f32.mrf.mxu0
    %606 = vdwg.mxu0
    %v607 = vadd.f32 %v604, %v69
    %v608 = vmax.f32 %v607, 0.0
    %v610 = vcombine.high %v604, %v604
    %v612 = vunpack.c.l.s4 1966171168
    %v613 = vunpack.c.0.s8 %v612
    %v614 = vlaneseq
    %v615 = vshrl.u32 %v614, 7
    %v616 = vsub.s32 %v613, %v615
    %v617 = vrot.slane %v604, %v616
    %v619 = vunpack.c.l.s4 1966171168
    %v620 = vunpack.c.0.s8 %v619
    %v621 = vlaneseq
    %v622 = vshrl.u32 %v621, 7
    %v623 = vsub.s32 %v620, %v622
    %v624 = vrot.slane %v610, %v623
    %v625 = vcombine.high %v617, %v617
    %v626 = vcombine.high %v624, %v624
    %v628 = vunpack.c.l.s4 1966171168
    %v629 = vunpack.c.0.s8 %v628
    %v630 = vlaneseq
    %v631 = vshrl.u32 %v630, 7
    %v632 = vsub.s32 %v629, %v631
    %v633 = vrot.slane %v617, %v632
    %v635 = vunpack.c.l.s4 1966171168
    %v636 = vunpack.c.0.s8 %v635
    %v637 = vlaneseq
    %v638 = vshrl.u32 %v637, 7
    %v639 = vsub.s32 %v636, %v638
    %v640 = vrot.slane %v624, %v639
    %v642 = vunpack.c.l.s4 1966171168
    %v643 = vunpack.c.0.s8 %v642
    %v644 = vlaneseq
    %v645 = vshrl.u32 %v644, 7
    %v646 = vsub.s32 %v643, %v645
    %v647 = vrot.slane %v625, %v646
    %v649 = vunpack.c.l.s4 1966171168
    %v650 = vunpack.c.0.s8 %v649
    %v651 = vlaneseq
    %v652 = vshrl.u32 %v651, 7
    %v653 = vsub.s32 %v650, %v652
    %v654 = vrot.slane %v626, %v653
    %v655 = vcombine.high %v633, %v633
    %v656 = vcombine.high %v640, %v640
    %v657 = vcombine.high %v647, %v647
    %v658 = vcombine.high %v654, %v654
    %v659 = vlaneseq
    %v660 = vshrl.u32 %v659, 7
    %v661 = vsub.s32 0, %v660
    %v662 = vrot.slane %v633, %v661
    %v663 = vlaneseq
    %v664 = vshrl.u32 %v663, 7
    %v665 = vsub.s32 0, %v664
    %v666 = vrot.slane %v647, %v665
    %v667 = vlaneseq
    %v668 = vshrl.u32 %v667, 7
    %v669 = vsub.s32 0, %v668
    %v670 = vrot.slane %v655, %v669
    %v671 = vlaneseq
    %v672 = vshrl.u32 %v671, 7
    %v673 = vsub.s32 0, %v672
    %v674 = vrot.slane %v657, %v673
    %v675 = vlaneseq
    %v676 = vshrl.u32 %v675, 7
    %v677 = vsub.s32 0, %v676
    %v678 = vrot.slane %v640, %v677
    %v679 = vlaneseq
    %v680 = vshrl.u32 %v679, 7
    %v681 = vsub.s32 0, %v680
    %v682 = vrot.slane %v654, %v681
    %v683 = vlaneseq
    %v684 = vshrl.u32 %v683, 7
    %v685 = vsub.s32 0, %v684
    %v686 = vrot.slane %v656, %v685
    %v687 = vlaneseq
    %v688 = vshrl.u32 %v687, 7
    %v689 = vsub.s32 0, %v688
    %v690 = vrot.slane %v658, %v689
    %691 = vrot.lane.b32.xlu0 %v662, 96
    %v692 = vpop.permute.xlu0 %691
    %693 = vrot.lane.b32.xlu0 %v666, 96
    %v694 = vpop.permute.xlu0 %693
    %695 = vrot.lane.b32.xlu0 %v670, 96
    %v696 = vpop.permute.xlu0 %695
    %697 = vrot.lane.b32.xlu0 %v674, 96
    %v698 = vpop.permute.xlu0 %697
    %699 = vrot.lane.b32.xlu0 %v678, 96
    %v700 = vpop.permute.xlu0 %699
    %701 = vrot.lane.b32.xlu0 %v682, 96
    %v702 = vpop.permute.xlu0 %701
    %703 = vrot.lane.b32.xlu0 %v686, 96
    %v704 = vpop.permute.xlu0 %703
    %705 = vrot.lane.b32.xlu0 %v690, 96
    %v706 = vpop.permute.xlu0 %705
    %v715 = vadd.f32 %v111, %v692
    %v716 = vadd.f32 %v112, %v694
    %v717 = vadd.f32 %v113, %v696
    %v718 = vadd.f32 %v114, %v698
    %v719 = vadd.f32 %v115, %v700
    %v720 = vadd.f32 %v116, %v702
    %v721 = vadd.f32 %v117, %v704
    %v722 = vadd.f32 %v118, %v706
    %v723 = vstv %s63
    %v724 = vadd.f32 %v715, %v723
    %v725 = vadd.f32 %v716, %v723
    %v726 = vadd.f32 %v717, %v723
    %v727 = vadd.f32 %v718, %v723
    %v728 = vadd.f32 %v719, %v723
    %v729 = vadd.f32 %v720, %v723
    %v730 = vadd.f32 %v721, %v723
    %v731 = vadd.f32 %v722, %v723
    %v732 = vmax.f32 %v724, 0.0
    %v733 = vmax.f32 %v725, 0.0
    %v734 = vmax.f32 %v726, 0.0
    %v735 = vmax.f32 %v727, 0.0
    %v736 = vmax.f32 %v728, 0.0
    %v737 = vmax.f32 %v729, 0.0
    %v738 = vmax.f32 %v730, 0.0
    %v739 = vmax.f32 %v731, 0.0
    %vm740 = vcmask 7168
    %v741 = vsel %vm740, %v732, -inf
    %v742 = vrot.slane %v741, 4
    %v743 = vmax.f32 %v741, %v742
    %v744 = vrot.slane %v743, 2
    %v745 = vmax.f32 %v743, %v744
    %v746 = vrot.slane %v745, 1
    %v747 = vmax.f32 %v745, %v746
    %v748 = vsel %vm740, %v733, -inf
    %v749 = vrot.slane %v748, 4
    %v750 = vmax.f32 %v748, %v749
    %v751 = vrot.slane %v750, 2
    %v752 = vmax.f32 %v750, %v751
    %v753 = vrot.slane %v752, 1
    %v754 = vmax.f32 %v752, %v753
    %v755 = vsel %vm740, %v734, -inf
    %v756 = vrot.slane %v755, 4
    %v757 = vmax.f32 %v755, %v756
    %v758 = vrot.slane %v757, 2
    %v759 = vmax.f32 %v757, %v758
    %v760 = vrot.slane %v759, 1
    %v761 = vmax.f32 %v759, %v760
    %v762 = vsel %vm740, %v735, -inf
    %v763 = vrot.slane %v762, 4
    %v764 = vmax.f32 %v762, %v763
    %v765 = vrot.slane %v764, 2
    %v766 = vmax.f32 %v764, %v765
    %v767 = vrot.slane %v766, 1
    %v768 = vmax.f32 %v766, %v767
    %v769 = vsel %vm740, %v736, -inf
    %v770 = vrot.slane %v769, 4
    %v771 = vmax.f32 %v769, %v770
    %v772 = vrot.slane %v771, 2
    %v773 = vmax.f32 %v771, %v772
    %v774 = vrot.slane %v773, 1
    %v775 = vmax.f32 %v773, %v774
    %v776 = vsel %vm740, %v737, -inf
    %v777 = vrot.slane %v776, 4
    %v778 = vmax.f32 %v776, %v777
    %v779 = vrot.slane %v778, 2
    %v780 = vmax.f32 %v778, %v779
    %v781 = vrot.slane %v780, 1
    %v782 = vmax.f32 %v780, %v781
    %v783 = vsel %vm740, %v738, -inf
    %v784 = vrot.slane %v783, 4
    %v785 = vmax.f32 %v783, %v784
    %v786 = vrot.slane %v785, 2
    %v787 = vmax.f32 %v785, %v786
    %v788 = vrot.slane %v787, 1
    %v789 = vmax.f32 %v787, %v788
    %v790 = vsel %vm740, %v739, -inf
    %v791 = vrot.slane %v790, 4
    %v792 = vmax.f32 %v790, %v791
    %v793 = vrot.slane %v792, 2
    %v794 = vmax.f32 %v792, %v793
    %v795 = vrot.slane %v794, 1
    %v796 = vmax.f32 %v794, %v795
    %v797 = vsub.f32 %v732, %v747
    %v798 = vsub.f32 %v733, %v754
    %v799 = vsub.f32 %v734, %v761
    %v800 = vsub.f32 %v735, %v768
    %v801 = vsub.f32 %v736, %v775
    %v802 = vsub.f32 %v737, %v782
    %v803 = vsub.f32 %v738, %v789
    %v804 = vsub.f32 %v739, %v796
    %v805 = vmul.f32 %v797, 1.442695
    %v806 = vpow.pop %v805
    %v807 = vmul.f32 %v798, 1.442695
    %v808 = vpow.pop %v807
    %v809 = vmul.f32 %v799, 1.442695
    %v810 = vpow.pop %v809
    %v811 = vmul.f32 %v800, 1.442695
    %v812 = vpow.pop %v811
    %v813 = vmul.f32 %v801, 1.442695
    %v814 = vpow.pop %v813
    %v815 = vmul.f32 %v802, 1.442695
    %v816 = vpow.pop %v815
    %v817 = vmul.f32 %v803, 1.442695
    %v818 = vpow.pop %v817
    %v819 = vmul.f32 %v804, 1.442695
    %v820 = vpow.pop %v819
    %v821 = vmul.f32 %v806, %v50
    %v822 = vmul.f32 %v808, %v51
    %v823 = vmul.f32 %v810, %v52
    %v824 = vmul.f32 %v812, %v53
    %v825 = vmul.f32 %v814, %v54
    %v826 = vmul.f32 %v816, %v55
    %v827 = vmul.f32 %v818, %v56
    %v828 = vmul.f32 %v820, %v57
    %v829 = vsel %vm740, %v821, 0.0
    %v830 = vrot.slane %v829, 4
    %v831 = vadd.f32 %v829, %v830
    %v832 = vrot.slane %v831, 2
    %v833 = vadd.f32 %v831, %v832
    %v834 = vrot.slane %v833, 1
    %v835 = vadd.f32 %v833, %v834
    %v836 = vsel %vm740, %v822, 0.0
    %v837 = vrot.slane %v836, 4
    %v838 = vadd.f32 %v836, %v837
    %v839 = vrot.slane %v838, 2
    %v840 = vadd.f32 %v838, %v839
    %v841 = vrot.slane %v840, 1
    %v842 = vadd.f32 %v840, %v841
    %v843 = vsel %vm740, %v823, 0.0
    %v844 = vrot.slane %v843, 4
    %v845 = vadd.f32 %v843, %v844
    %v846 = vrot.slane %v845, 2
    %v847 = vadd.f32 %v845, %v846
    %v848 = vrot.slane %v847, 1
    %v849 = vadd.f32 %v847, %v848
    %v850 = vsel %vm740, %v824, 0.0
    %v851 = vrot.slane %v850, 4
    %v852 = vadd.f32 %v850, %v851
    %v853 = vrot.slane %v852, 2
    %v854 = vadd.f32 %v852, %v853
    %v855 = vrot.slane %v854, 1
    %v856 = vadd.f32 %v854, %v855
    %v857 = vsel %vm740, %v825, 0.0
    %v858 = vrot.slane %v857, 4
    %v859 = vadd.f32 %v857, %v858
    %v860 = vrot.slane %v859, 2
    %v861 = vadd.f32 %v859, %v860
    %v862 = vrot.slane %v861, 1
    %v863 = vadd.f32 %v861, %v862
    %v864 = vsel %vm740, %v826, 0.0
    %v865 = vrot.slane %v864, 4
    %v866 = vadd.f32 %v864, %v865
    %v867 = vrot.slane %v866, 2
    %v868 = vadd.f32 %v866, %v867
    %v869 = vrot.slane %v868, 1
    %v870 = vadd.f32 %v868, %v869
    %v871 = vsel %vm740, %v827, 0.0
    %v872 = vrot.slane %v871, 4
    %v873 = vadd.f32 %v871, %v872
    %v874 = vrot.slane %v873, 2
    %v875 = vadd.f32 %v873, %v874
    %v876 = vrot.slane %v875, 1
    %v877 = vadd.f32 %v875, %v876
    %v878 = vsel %vm740, %v828, 0.0
    %v879 = vrot.slane %v878, 4
    %v880 = vadd.f32 %v878, %v879
    %v881 = vrot.slane %v880, 2
    %v882 = vadd.f32 %v880, %v881
    %v883 = vrot.slane %v882, 1
    %v884 = vadd.f32 %v882, %v883
    %v885 = vadd.f32 %v835, 1e-05
    %v886 = vadd.f32 %v842, 1e-05
    %v887 = vadd.f32 %v849, 1e-05
    %v888 = vadd.f32 %v856, 1e-05
    %v889 = vadd.f32 %v863, 1e-05
    %v890 = vadd.f32 %v870, 1e-05
    %v891 = vadd.f32 %v877, 1e-05
    %v892 = vadd.f32 %v884, 1e-05
    %v893 = vrcp.pop %v885
    %v894 = vmul.f32 %v821, %v893
    %v895 = vrcp.pop %v886
    %v896 = vmul.f32 %v822, %v895
    %v897 = vrcp.pop %v887
    %v898 = vmul.f32 %v823, %v897
    %v899 = vrcp.pop %v888
    %v900 = vmul.f32 %v824, %v899
    %v901 = vrcp.pop %v889
    %v902 = vmul.f32 %v825, %v901
    %v903 = vrcp.pop %v890
    %v904 = vmul.f32 %v826, %v903
    %v905 = vrcp.pop %v891
    %v906 = vmul.f32 %v827, %v905
    %v907 = vrcp.pop %v892
    %v908 = vmul.f32 %v828, %v907
    %v909 = vmul.f32 %v50, %v894
    %v910 = vmul.f32 %v51, %v896
    %v911 = vmul.f32 %v52, %v898
    %v912 = vmul.f32 %v53, %v900
    %v913 = vmul.f32 %v54, %v902
    %v914 = vmul.f32 %v55, %v904
    %v915 = vmul.f32 %v56, %v906
    %v916 = vmul.f32 %v57, %v908
    %918 = vset.pattern.permute.xlu0 0
    %919 = vperm.xlu0 %918, %v909
    %v920 = vpop.permute.xlu0 %919
    %923 = vset.pattern.permute.xlu0 0
    %924 = vperm.xlu0 %923, %v910
    %v925 = vpop.permute.xlu0 %924
    %928 = vset.pattern.permute.xlu0 0
    %929 = vperm.xlu0 %928, %v911
    %v930 = vpop.permute.xlu0 %929
    %933 = vset.pattern.permute.xlu0 0
    %934 = vperm.xlu0 %933, %v912
    %v935 = vpop.permute.xlu0 %934
    %938 = vset.pattern.permute.xlu0 0
    %939 = vperm.xlu0 %938, %v913
    %v940 = vpop.permute.xlu0 %939
    %943 = vset.pattern.permute.xlu0 0
    %944 = vperm.xlu0 %943, %v914
    %v945 = vpop.permute.xlu0 %944
    %948 = vset.pattern.permute.xlu0 0
    %949 = vperm.xlu0 %948, %v915
    %v950 = vpop.permute.xlu0 %949
    %953 = vset.pattern.permute.xlu0 0
    %954 = vperm.xlu0 %953, %v916
    %v955 = vpop.permute.xlu0 %954
    %v957 = vmul.f32 %v42, %v920
    %v958 = vmul.f32 %v43, %v925
    %v959 = vmul.f32 %v44, %v930
    %v960 = vmul.f32 %v45, %v935
    %v961 = vmul.f32 %v46, %v940
    %v962 = vmul.f32 %v47, %v945
    %v963 = vmul.f32 %v48, %v950
    %v964 = vmul.f32 %v49, %v955
    %v965 = vsel %vm86, %v957, 0.0
    %v966 = vrot.slane %v965, 4
    %v967 = vadd.f32 %v965, %v966
    %v968 = vrot.slane %v967, 2
    %v969 = vadd.f32 %v967, %v968
    %v970 = vrot.slane %v969, 1
    %v971 = vadd.f32 %v969, %v970
    %v972 = vsel %vm86, %v958, 0.0
    %v973 = vrot.slane %v972, 4
    %v974 = vadd.f32 %v972, %v973
    %v975 = vrot.slane %v974, 2
    %v976 = vadd.f32 %v974, %v975
    %v977 = vrot.slane %v976, 1
    %v978 = vadd.f32 %v976, %v977
    %v979 = vsel %vm86, %v959, 0.0
    %v980 = vrot.slane %v979, 4
    %v981 = vadd.f32 %v979, %v980
    %v982 = vrot.slane %v981, 2
    %v983 = vadd.f32 %v981, %v982
    %v984 = vrot.slane %v983, 1
    %v985 = vadd.f32 %v983, %v984
    %v986 = vsel %vm86, %v960, 0.0
    %v987 = vrot.slane %v986, 4
    %v988 = vadd.f32 %v986, %v987
    %v989 = vrot.slane %v988, 2
    %v990 = vadd.f32 %v988, %v989
    %v991 = vrot.slane %v990, 1
    %v992 = vadd.f32 %v990, %v991
    %v993 = vsel %vm86, %v961, 0.0
    %v994 = vrot.slane %v993, 4
    %v995 = vadd.f32 %v993, %v994
    %v996 = vrot.slane %v995, 2
    %v997 = vadd.f32 %v995, %v996
    %v998 = vrot.slane %v997, 1
    %v999 = vadd.f32 %v997, %v998
    %v1000 = vsel %vm86, %v962, 0.0
    %v1001 = vrot.slane %v1000, 4
    %v1002 = vadd.f32 %v1000, %v1001
    %v1003 = vrot.slane %v1002, 2
    %v1004 = vadd.f32 %v1002, %v1003
    %v1005 = vrot.slane %v1004, 1
    %v1006 = vadd.f32 %v1004, %v1005
    %v1007 = vsel %vm86, %v963, 0.0
    %v1008 = vrot.slane %v1007, 4
    %v1009 = vadd.f32 %v1007, %v1008
    %v1010 = vrot.slane %v1009, 2
    %v1011 = vadd.f32 %v1009, %v1010
    %v1012 = vrot.slane %v1011, 1
    %v1013 = vadd.f32 %v1011, %v1012
    %v1014 = vsel %vm86, %v964, 0.0
    %v1015 = vrot.slane %v1014, 4
    %v1016 = vadd.f32 %v1014, %v1015
    %v1017 = vrot.slane %v1016, 2
    %v1018 = vadd.f32 %v1016, %v1017
    %v1019 = vrot.slane %v1018, 1
    %v1020 = vadd.f32 %v1018, %v1019
    %vm1029 = vcmask 1041409
    %v1030 = vsel %vm1029, %v978, %v971
    %vm1031 = vcmask 1042434
    %v1032 = vsel %vm1031, %v985, %v1030
    %vm1033 = vcmask 1043459
    %v1034 = vsel %vm1033, %v992, %v1032
    %vm1035 = vcmask 1044484
    %v1036 = vsel %vm1035, %v999, %v1034
    %vm1037 = vcmask 1045509
    %v1038 = vsel %vm1037, %v1006, %v1036
    %vm1039 = vcmask 1046534
    %v1040 = vsel %vm1039, %v1013, %v1038
    %vm1041 = vcmask 1047559
    %v1042 = vsel %vm1041, %v1020, %v1040
    %v1044 = vadd.f32 %v608, %v1042
    %v1046 = vsel %vm86, %v1044, 0
    %1048 = vmatprep.subr.mxu0 0.0
    %1049 = vmatpush1.msra.mxu0 0.0
    %1050 = vmatprep.subr.mxu0 0.0
    %1051 = vmatpush1.msra.mxu0 0.0
    %1052 = vmatprep.subr.mxu0 0.0
    %1053 = vmatpush1.msra.mxu0 0.0
    %1054 = vmatprep.subr.mxu0 0.0
    %1055 = vmatpush1.msra.mxu0 0.0
    %1056 = vmatprep.subr.mxu0 0.0
    %1057 = vmatpush1.msra.mxu0 0.0
    %1058 = vmatprep.subr.mxu0 0.0
    %1059 = vmatpush1.msra.mxu0 0.0
    %1060 = vmatprep.subr.mxu0 0.0
    %1061 = vmatpush1.msra.mxu0 0.0
    %1062 = vmatprep.subr.mxu0 0.0
    %1063 = vmatpush1.msra.mxu0 0.0
    %1064 = vmatprep.subr.mxu0 0.0
    %1065 = vmatpush1.msra.mxu0 0.0
    %1066 = vmatprep.subr.mxu0 0.0
    %1067 = vmatpush1.msra.mxu0 0.0
    %1068 = vmatprep.subr.mxu0 0.0
    %1069 = vmatpush1.msra.mxu0 0.0
    %1070 = vmatprep.subr.mxu0 0.0
    %1071 = vmatpush1.msra.mxu0 0.0
    %1072 = vmatprep.subr.mxu0 0.0
    %v1073 = vand.u32 %v62, 4294901760
    %1074 = vmatpush1.msra.mxu0 %v1073
    %1075 = vmatprep.subr.mxu0 0.0
    %v1076 = vand.u32 %v61, 4294901760
    %1077 = vmatpush1.msra.mxu0 %v1076
    %1078 = vmatprep.subr.mxu0 0.0
    %v1079 = vand.u32 %v60, 4294901760
    %1080 = vmatpush1.msra.mxu0 %v1079
    %1081 = vmatprep.subr.mxu0 0.0
    %v1082 = vand.u32 %v59, 4294901760
    %1083 = vmatpush1.msra.mxu0 %v1082
    %1084 = vmatprep.subr.mxu0 0.0
    %1085 = vmatpush2.msra.mxu0 0.0
    %1086 = vmatprep.subr.mxu0 0.0
    %1087 = vmatpush2.msra.mxu0 0.0
    %1088 = vmatprep.subr.mxu0 0.0
    %1089 = vmatpush2.msra.mxu0 0.0
    %1090 = vmatprep.subr.mxu0 0.0
    %1091 = vmatpush2.msra.mxu0 0.0
    %1092 = vmatprep.subr.mxu0 0.0
    %1093 = vmatpush2.msra.mxu0 0.0
    %1094 = vmatprep.subr.mxu0 0.0
    %1095 = vmatpush2.msra.mxu0 0.0
    %1096 = vmatprep.subr.mxu0 0.0
    %1097 = vmatpush2.msra.mxu0 0.0
    %1098 = vmatprep.subr.mxu0 0.0
    %1099 = vmatpush2.msra.mxu0 0.0
    %1100 = vmatprep.subr.mxu0 0.0
    %1101 = vmatpush2.msra.mxu0 0.0
    %1102 = vmatprep.subr.mxu0 0.0
    %1103 = vmatpush2.msra.mxu0 0.0
    %1104 = vmatprep.subr.mxu0 0.0
    %1105 = vmatpush2.msra.mxu0 0.0
    %1106 = vmatprep.subr.mxu0 0.0
    %1107 = vmatpush2.msra.mxu0 0.0
    %1108 = vmatprep.subr.mxu0 0.0
    %1109 = vmatpush2.msra.mxu0 0.0
    %1110 = vmatprep.subr.mxu0 0.0
    %1111 = vmatpush2.msra.mxu0 0.0
    %1112 = vmatprep.subr.mxu0 0.0
    %1113 = vmatpush2.msra.mxu0 0.0
    %1114 = vmatprep.subr.mxu0 0.0
    %1115 = vmatpush2.msra.mxu0 0.0
    %1116 = vmatprep.mubr.f32.mxu0 0.0
    %v1117 = vand.u32 %v1046, 4294901760
    %v1118 = vsub.f32 %v1046, %v1117
    %v1119 = vand.u32 %v1118, 4294901760
    %v1120 = vsub.f32 %v1118, %v1119
    %v1121 = vand.u32 %v1120, 4294901760
    %1122 = vmatmul.mubr.f32.gmra.mxu0 %v1121
    %v1123 = vpop.f32.mrf.mxu0
    %v1124 = vadd.f32 0.0, %v1123
    %v1125 = vpop.f32.mrf.mxu0
    %1126 = vdwg.mxu0
    %1127 = vmatprep.subr.mxu0 0.0
    %1128 = vmatpush1.msra.mxu0 0.0
    %1129 = vmatprep.subr.mxu0 0.0
    %1130 = vmatpush1.msra.mxu0 0.0
    %1131 = vmatprep.subr.mxu0 0.0
    %1132 = vmatpush1.msra.mxu0 0.0
    %1133 = vmatprep.subr.mxu0 0.0
    %1134 = vmatpush1.msra.mxu0 0.0
    %1135 = vmatprep.subr.mxu0 0.0
    %1136 = vmatpush1.msra.mxu0 0.0
    %1137 = vmatprep.subr.mxu0 0.0
    %1138 = vmatpush1.msra.mxu0 0.0
    %1139 = vmatprep.subr.mxu0 0.0
    %1140 = vmatpush1.msra.mxu0 0.0
    %1141 = vmatprep.subr.mxu0 0.0
    %1142 = vmatpush1.msra.mxu0 0.0
    %1143 = vmatprep.subr.mxu0 0.0
    %1144 = vmatpush1.msra.mxu0 0.0
    %1145 = vmatprep.subr.mxu0 0.0
    %1146 = vmatpush1.msra.mxu0 0.0
    %1147 = vmatprep.subr.mxu0 0.0
    %1148 = vmatpush1.msra.mxu0 0.0
    %1149 = vmatprep.subr.mxu0 0.0
    %1150 = vmatpush1.msra.mxu0 0.0
    %1151 = vmatprep.subr.mxu0 0.0
    %v1152 = vand.u32 %v62, 4294901760
    %v1153 = vsub.f32 %v62, %v1152
    %v1154 = vand.u32 %v1153, 4294901760
    %v1155 = vsub.f32 %v1153, %v1154
    %v1156 = vand.u32 %v1155, 4294901760
    %1157 = vmatpush1.msra.mxu0 %v1156
    %1158 = vmatprep.subr.mxu0 0.0
    %v1159 = vand.u32 %v61, 4294901760
    %v1160 = vsub.f32 %v61, %v1159
    %v1161 = vand.u32 %v1160, 4294901760
    %v1162 = vsub.f32 %v1160, %v1161
    %v1163 = vand.u32 %v1162, 4294901760
    %1164 = vmatpush1.msra.mxu0 %v1163
    %1165 = vmatprep.subr.mxu0 0.0
    %v1166 = vand.u32 %v60, 4294901760
    %v1167 = vsub.f32 %v60, %v1166
    %v1168 = vand.u32 %v1167, 4294901760
    %v1169 = vsub.f32 %v1167, %v1168
    %v1170 = vand.u32 %v1169, 4294901760
    %1171 = vmatpush1.msra.mxu0 %v1170
    %1172 = vmatprep.subr.mxu0 0.0
    %v1173 = vand.u32 %v59, 4294901760
    %v1174 = vsub.f32 %v59, %v1173
    %v1175 = vand.u32 %v1174, 4294901760
    %v1176 = vsub.f32 %v1174, %v1175
    %v1177 = vand.u32 %v1176, 4294901760
    %1178 = vmatpush1.msra.mxu0 %v1177
    %1179 = vmatprep.subr.mxu0 0.0
    %1180 = vmatpush2.msra.mxu0 0.0
    %1181 = vmatprep.subr.mxu0 0.0
    %1182 = vmatpush2.msra.mxu0 0.0
    %1183 = vmatprep.subr.mxu0 0.0
    %1184 = vmatpush2.msra.mxu0 0.0
    %1185 = vmatprep.subr.mxu0 0.0
    %1186 = vmatpush2.msra.mxu0 0.0
    %1187 = vmatprep.subr.mxu0 0.0
    %1188 = vmatpush2.msra.mxu0 0.0
    %1189 = vmatprep.subr.mxu0 0.0
    %1190 = vmatpush2.msra.mxu0 0.0
    %1191 = vmatprep.subr.mxu0 0.0
    %1192 = vmatpush2.msra.mxu0 0.0
    %1193 = vmatprep.subr.mxu0 0.0
    %1194 = vmatpush2.msra.mxu0 0.0
    %1195 = vmatprep.subr.mxu0 0.0
    %1196 = vmatpush2.msra.mxu0 0.0
    %1197 = vmatprep.subr.mxu0 0.0
    %1198 = vmatpush2.msra.mxu0 0.0
    %1199 = vmatprep.subr.mxu0 0.0
    %1200 = vmatpush2.msra.mxu0 0.0
    %1201 = vmatprep.subr.mxu0 0.0
    %1202 = vmatpush2.msra.mxu0 0.0
    %1203 = vmatprep.subr.mxu0 0.0
    %1204 = vmatpush2.msra.mxu0 0.0
    %1205 = vmatprep.subr.mxu0 0.0
    %1206 = vmatpush2.msra.mxu0 0.0
    %1207 = vmatprep.subr.mxu0 0.0
    %1208 = vmatpush2.msra.mxu0 0.0
    %1209 = vmatprep.subr.mxu0 0.0
    %1210 = vmatpush2.msra.mxu0 0.0
    %1211 = vmatprep.mubr.f32.mxu0 0.0
    %v1212 = vand.u32 %v1046, 4294901760
    %1213 = vmatmul.mubr.f32.gmra.mxu0 %v1212
    %v1214 = vpop.f32.mrf.mxu0
    %v1215 = vadd.f32 %v1124, %v1214
    %v1216 = vpop.f32.mrf.mxu0
    %1217 = vdwg.mxu0
    %1218 = vmatprep.subr.mxu0 0.0
    %1219 = vmatpush1.msra.mxu0 0.0
    %1220 = vmatprep.subr.mxu0 0.0
    %1221 = vmatpush1.msra.mxu0 0.0
    %1222 = vmatprep.subr.mxu0 0.0
    %1223 = vmatpush1.msra.mxu0 0.0
    %1224 = vmatprep.subr.mxu0 0.0
    %1225 = vmatpush1.msra.mxu0 0.0
    %1226 = vmatprep.subr.mxu0 0.0
    %1227 = vmatpush1.msra.mxu0 0.0
    %1228 = vmatprep.subr.mxu0 0.0
    %1229 = vmatpush1.msra.mxu0 0.0
    %1230 = vmatprep.subr.mxu0 0.0
    %1231 = vmatpush1.msra.mxu0 0.0
    %1232 = vmatprep.subr.mxu0 0.0
    %1233 = vmatpush1.msra.mxu0 0.0
    %1234 = vmatprep.subr.mxu0 0.0
    %1235 = vmatpush1.msra.mxu0 0.0
    %1236 = vmatprep.subr.mxu0 0.0
    %1237 = vmatpush1.msra.mxu0 0.0
    %1238 = vmatprep.subr.mxu0 0.0
    %1239 = vmatpush1.msra.mxu0 0.0
    %1240 = vmatprep.subr.mxu0 0.0
    %1241 = vmatpush1.msra.mxu0 0.0
    %1242 = vmatprep.subr.mxu0 0.0
    %v1243 = vand.u32 %v62, 4294901760
    %v1244 = vsub.f32 %v62, %v1243
    %1245 = vmatpush1.msra.mxu0 %v1244
    %1246 = vmatprep.subr.mxu0 0.0
    %v1247 = vand.u32 %v61, 4294901760
    %v1248 = vsub.f32 %v61, %v1247
    %1249 = vmatpush1.msra.mxu0 %v1248
    %1250 = vmatprep.subr.mxu0 0.0
    %v1251 = vand.u32 %v60, 4294901760
    %v1252 = vsub.f32 %v60, %v1251
    %1253 = vmatpush1.msra.mxu0 %v1252
    %1254 = vmatprep.subr.mxu0 0.0
    %v1255 = vand.u32 %v59, 4294901760
    %v1256 = vsub.f32 %v59, %v1255
    %1257 = vmatpush1.msra.mxu0 %v1256
    %1258 = vmatprep.subr.mxu0 0.0
    %1259 = vmatpush2.msra.mxu0 0.0
    %1260 = vmatprep.subr.mxu0 0.0
    %1261 = vmatpush2.msra.mxu0 0.0
    %1262 = vmatprep.subr.mxu0 0.0
    %1263 = vmatpush2.msra.mxu0 0.0
    %1264 = vmatprep.subr.mxu0 0.0
    %1265 = vmatpush2.msra.mxu0 0.0
    %1266 = vmatprep.subr.mxu0 0.0
    %1267 = vmatpush2.msra.mxu0 0.0
    %1268 = vmatprep.subr.mxu0 0.0
    %1269 = vmatpush2.msra.mxu0 0.0
    %1270 = vmatprep.subr.mxu0 0.0
    %1271 = vmatpush2.msra.mxu0 0.0
    %1272 = vmatprep.subr.mxu0 0.0
    %1273 = vmatpush2.msra.mxu0 0.0
    %1274 = vmatprep.subr.mxu0 0.0
    %1275 = vmatpush2.msra.mxu0 0.0
    %1276 = vmatprep.subr.mxu0 0.0
    %1277 = vmatpush2.msra.mxu0 0.0
    %1278 = vmatprep.subr.mxu0 0.0
    %1279 = vmatpush2.msra.mxu0 0.0
    %1280 = vmatprep.subr.mxu0 0.0
    %1281 = vmatpush2.msra.mxu0 0.0
    %1282 = vmatprep.subr.mxu0 0.0
    %1283 = vmatpush2.msra.mxu0 0.0
    %1284 = vmatprep.subr.mxu0 0.0
    %1285 = vmatpush2.msra.mxu0 0.0
    %1286 = vmatprep.subr.mxu0 0.0
    %1287 = vmatpush2.msra.mxu0 0.0
    %1288 = vmatprep.subr.mxu0 0.0
    %1289 = vmatpush2.msra.mxu0 0.0
    %1290 = vmatprep.mubr.f32.mxu0 0.0
    %v1291 = vand.u32 %v1046, 4294901760
    %v1292 = vsub.f32 %v1046, %v1291
    %1293 = vmatmul.mubr.f32.gmra.mxu0 %v1292
    %v1294 = vpop.f32.mrf.mxu0
    %v1295 = vadd.f32 %v1215, %v1294
    %v1296 = vpop.f32.mrf.mxu0
    %1297 = vdwg.mxu0
    %1298 = vmatprep.subr.mxu0 0.0
    %1299 = vmatpush1.msra.mxu0 0.0
    %1300 = vmatprep.subr.mxu0 0.0
    %1301 = vmatpush1.msra.mxu0 0.0
    %1302 = vmatprep.subr.mxu0 0.0
    %1303 = vmatpush1.msra.mxu0 0.0
    %1304 = vmatprep.subr.mxu0 0.0
    %1305 = vmatpush1.msra.mxu0 0.0
    %1306 = vmatprep.subr.mxu0 0.0
    %1307 = vmatpush1.msra.mxu0 0.0
    %1308 = vmatprep.subr.mxu0 0.0
    %1309 = vmatpush1.msra.mxu0 0.0
    %1310 = vmatprep.subr.mxu0 0.0
    %1311 = vmatpush1.msra.mxu0 0.0
    %1312 = vmatprep.subr.mxu0 0.0
    %1313 = vmatpush1.msra.mxu0 0.0
    %1314 = vmatprep.subr.mxu0 0.0
    %1315 = vmatpush1.msra.mxu0 0.0
    %1316 = vmatprep.subr.mxu0 0.0
    %1317 = vmatpush1.msra.mxu0 0.0
    %1318 = vmatprep.subr.mxu0 0.0
    %1319 = vmatpush1.msra.mxu0 0.0
    %1320 = vmatprep.subr.mxu0 0.0
    %1321 = vmatpush1.msra.mxu0 0.0
    %1322 = vmatprep.subr.mxu0 0.0
    %v1323 = vand.u32 %v62, 4294901760
    %1324 = vmatpush1.msra.mxu0 %v1323
    %1325 = vmatprep.subr.mxu0 0.0
    %v1326 = vand.u32 %v61, 4294901760
    %1327 = vmatpush1.msra.mxu0 %v1326
    %1328 = vmatprep.subr.mxu0 0.0
    %v1329 = vand.u32 %v60, 4294901760
    %1330 = vmatpush1.msra.mxu0 %v1329
    %1331 = vmatprep.subr.mxu0 0.0
    %v1332 = vand.u32 %v59, 4294901760
    %1333 = vmatpush1.msra.mxu0 %v1332
    %1334 = vmatprep.subr.mxu0 0.0
    %1335 = vmatpush2.msra.mxu0 0.0
    %1336 = vmatprep.subr.mxu0 0.0
    %1337 = vmatpush2.msra.mxu0 0.0
    %1338 = vmatprep.subr.mxu0 0.0
    %1339 = vmatpush2.msra.mxu0 0.0
    %1340 = vmatprep.subr.mxu0 0.0
    %1341 = vmatpush2.msra.mxu0 0.0
    %1342 = vmatprep.subr.mxu0 0.0
    %1343 = vmatpush2.msra.mxu0 0.0
    %1344 = vmatprep.subr.mxu0 0.0
    %1345 = vmatpush2.msra.mxu0 0.0
    %1346 = vmatprep.subr.mxu0 0.0
    %1347 = vmatpush2.msra.mxu0 0.0
    %1348 = vmatprep.subr.mxu0 0.0
    %1349 = vmatpush2.msra.mxu0 0.0
    %1350 = vmatprep.subr.mxu0 0.0
    %1351 = vmatpush2.msra.mxu0 0.0
    %1352 = vmatprep.subr.mxu0 0.0
    %1353 = vmatpush2.msra.mxu0 0.0
    %1354 = vmatprep.subr.mxu0 0.0
    %1355 = vmatpush2.msra.mxu0 0.0
    %1356 = vmatprep.subr.mxu0 0.0
    %1357 = vmatpush2.msra.mxu0 0.0
    %1358 = vmatprep.subr.mxu0 0.0
    %1359 = vmatpush2.msra.mxu0 0.0
    %1360 = vmatprep.subr.mxu0 0.0
    %1361 = vmatpush2.msra.mxu0 0.0
    %1362 = vmatprep.subr.mxu0 0.0
    %1363 = vmatpush2.msra.mxu0 0.0
    %1364 = vmatprep.subr.mxu0 0.0
    %1365 = vmatpush2.msra.mxu0 0.0
    %1366 = vmatprep.mubr.f32.mxu0 0.0
    %v1367 = vand.u32 %v1046, 4294901760
    %v1368 = vsub.f32 %v1046, %v1367
    %v1369 = vand.u32 %v1368, 4294901760
    %1370 = vmatmul.mubr.f32.gmra.mxu0 %v1369
    %v1371 = vpop.f32.mrf.mxu0
    %v1372 = vadd.f32 %v1295, %v1371
    %v1373 = vpop.f32.mrf.mxu0
    %1374 = vdwg.mxu0
    %1375 = vmatprep.subr.mxu0 0.0
    %1376 = vmatpush1.msra.mxu0 0.0
    %1377 = vmatprep.subr.mxu0 0.0
    %1378 = vmatpush1.msra.mxu0 0.0
    %1379 = vmatprep.subr.mxu0 0.0
    %1380 = vmatpush1.msra.mxu0 0.0
    %1381 = vmatprep.subr.mxu0 0.0
    %1382 = vmatpush1.msra.mxu0 0.0
    %1383 = vmatprep.subr.mxu0 0.0
    %1384 = vmatpush1.msra.mxu0 0.0
    %1385 = vmatprep.subr.mxu0 0.0
    %1386 = vmatpush1.msra.mxu0 0.0
    %1387 = vmatprep.subr.mxu0 0.0
    %1388 = vmatpush1.msra.mxu0 0.0
    %1389 = vmatprep.subr.mxu0 0.0
    %1390 = vmatpush1.msra.mxu0 0.0
    %1391 = vmatprep.subr.mxu0 0.0
    %1392 = vmatpush1.msra.mxu0 0.0
    %1393 = vmatprep.subr.mxu0 0.0
    %1394 = vmatpush1.msra.mxu0 0.0
    %1395 = vmatprep.subr.mxu0 0.0
    %1396 = vmatpush1.msra.mxu0 0.0
    %1397 = vmatprep.subr.mxu0 0.0
    %1398 = vmatpush1.msra.mxu0 0.0
    %1399 = vmatprep.subr.mxu0 0.0
    %v1400 = vand.u32 %v62, 4294901760
    %v1401 = vsub.f32 %v62, %v1400
    %v1402 = vand.u32 %v1401, 4294901760
    %1403 = vmatpush1.msra.mxu0 %v1402
    %1404 = vmatprep.subr.mxu0 0.0
    %v1405 = vand.u32 %v61, 4294901760
    %v1406 = vsub.f32 %v61, %v1405
    %v1407 = vand.u32 %v1406, 4294901760
    %1408 = vmatpush1.msra.mxu0 %v1407
    %1409 = vmatprep.subr.mxu0 0.0
    %v1410 = vand.u32 %v60, 4294901760
    %v1411 = vsub.f32 %v60, %v1410
    %v1412 = vand.u32 %v1411, 4294901760
    %1413 = vmatpush1.msra.mxu0 %v1412
    %1414 = vmatprep.subr.mxu0 0.0
    %v1415 = vand.u32 %v59, 4294901760
    %v1416 = vsub.f32 %v59, %v1415
    %v1417 = vand.u32 %v1416, 4294901760
    %1418 = vmatpush1.msra.mxu0 %v1417
    %1419 = vmatprep.subr.mxu0 0.0
    %1420 = vmatpush2.msra.mxu0 0.0
    %1421 = vmatprep.subr.mxu0 0.0
    %1422 = vmatpush2.msra.mxu0 0.0
    %1423 = vmatprep.subr.mxu0 0.0
    %1424 = vmatpush2.msra.mxu0 0.0
    %1425 = vmatprep.subr.mxu0 0.0
    %1426 = vmatpush2.msra.mxu0 0.0
    %1427 = vmatprep.subr.mxu0 0.0
    %1428 = vmatpush2.msra.mxu0 0.0
    %1429 = vmatprep.subr.mxu0 0.0
    %1430 = vmatpush2.msra.mxu0 0.0
    %1431 = vmatprep.subr.mxu0 0.0
    %1432 = vmatpush2.msra.mxu0 0.0
    %1433 = vmatprep.subr.mxu0 0.0
    %1434 = vmatpush2.msra.mxu0 0.0
    %1435 = vmatprep.subr.mxu0 0.0
    %1436 = vmatpush2.msra.mxu0 0.0
    %1437 = vmatprep.subr.mxu0 0.0
    %1438 = vmatpush2.msra.mxu0 0.0
    %1439 = vmatprep.subr.mxu0 0.0
    %1440 = vmatpush2.msra.mxu0 0.0
    %1441 = vmatprep.subr.mxu0 0.0
    %1442 = vmatpush2.msra.mxu0 0.0
    %1443 = vmatprep.subr.mxu0 0.0
    %1444 = vmatpush2.msra.mxu0 0.0
    %1445 = vmatprep.subr.mxu0 0.0
    %1446 = vmatpush2.msra.mxu0 0.0
    %1447 = vmatprep.subr.mxu0 0.0
    %1448 = vmatpush2.msra.mxu0 0.0
    %1449 = vmatprep.subr.mxu0 0.0
    %1450 = vmatpush2.msra.mxu0 0.0
    %1451 = vmatprep.mubr.f32.mxu0 0.0
    %v1452 = vand.u32 %v1046, 4294901760
    %1453 = vmatmul.mubr.f32.gmra.mxu0 %v1452
    %v1454 = vpop.f32.mrf.mxu0
    %v1455 = vadd.f32 %v1372, %v1454
    %v1456 = vpop.f32.mrf.mxu0
    %1457 = vdwg.mxu0
    %1458 = vmatprep.subr.mxu0 0.0
    %1459 = vmatpush1.msra.mxu0 0.0
    %1460 = vmatprep.subr.mxu0 0.0
    %1461 = vmatpush1.msra.mxu0 0.0
    %1462 = vmatprep.subr.mxu0 0.0
    %1463 = vmatpush1.msra.mxu0 0.0
    %1464 = vmatprep.subr.mxu0 0.0
    %1465 = vmatpush1.msra.mxu0 0.0
    %1466 = vmatprep.subr.mxu0 0.0
    %1467 = vmatpush1.msra.mxu0 0.0
    %1468 = vmatprep.subr.mxu0 0.0
    %1469 = vmatpush1.msra.mxu0 0.0
    %1470 = vmatprep.subr.mxu0 0.0
    %1471 = vmatpush1.msra.mxu0 0.0
    %1472 = vmatprep.subr.mxu0 0.0
    %1473 = vmatpush1.msra.mxu0 0.0
    %1474 = vmatprep.subr.mxu0 0.0
    %1475 = vmatpush1.msra.mxu0 0.0
    %1476 = vmatprep.subr.mxu0 0.0
    %1477 = vmatpush1.msra.mxu0 0.0
    %1478 = vmatprep.subr.mxu0 0.0
    %1479 = vmatpush1.msra.mxu0 0.0
    %1480 = vmatprep.subr.mxu0 0.0
    %1481 = vmatpush1.msra.mxu0 0.0
    %1482 = vmatprep.subr.mxu0 0.0
    %v1483 = vand.u32 %v62, 4294901760
    %1484 = vmatpush1.msra.mxu0 %v1483
    %1485 = vmatprep.subr.mxu0 0.0
    %v1486 = vand.u32 %v61, 4294901760
    %1487 = vmatpush1.msra.mxu0 %v1486
    %1488 = vmatprep.subr.mxu0 0.0
    %v1489 = vand.u32 %v60, 4294901760
    %1490 = vmatpush1.msra.mxu0 %v1489
    %1491 = vmatprep.subr.mxu0 0.0
    %v1492 = vand.u32 %v59, 4294901760
    %1493 = vmatpush1.msra.mxu0 %v1492
    %1494 = vmatprep.subr.mxu0 0.0
    %1495 = vmatpush2.msra.mxu0 0.0
    %1496 = vmatprep.subr.mxu0 0.0
    %1497 = vmatpush2.msra.mxu0 0.0
    %1498 = vmatprep.subr.mxu0 0.0
    %1499 = vmatpush2.msra.mxu0 0.0
    %1500 = vmatprep.subr.mxu0 0.0
    %1501 = vmatpush2.msra.mxu0 0.0
    %1502 = vmatprep.subr.mxu0 0.0
    %1503 = vmatpush2.msra.mxu0 0.0
    %1504 = vmatprep.subr.mxu0 0.0
    %1505 = vmatpush2.msra.mxu0 0.0
    %1506 = vmatprep.subr.mxu0 0.0
    %1507 = vmatpush2.msra.mxu0 0.0
    %1508 = vmatprep.subr.mxu0 0.0
    %1509 = vmatpush2.msra.mxu0 0.0
    %1510 = vmatprep.subr.mxu0 0.0
    %1511 = vmatpush2.msra.mxu0 0.0
    %1512 = vmatprep.subr.mxu0 0.0
    %1513 = vmatpush2.msra.mxu0 0.0
    %1514 = vmatprep.subr.mxu0 0.0
    %1515 = vmatpush2.msra.mxu0 0.0
    %1516 = vmatprep.subr.mxu0 0.0
    %1517 = vmatpush2.msra.mxu0 0.0
    %1518 = vmatprep.subr.mxu0 0.0
    %1519 = vmatpush2.msra.mxu0 0.0
    %1520 = vmatprep.subr.mxu0 0.0
    %1521 = vmatpush2.msra.mxu0 0.0
    %1522 = vmatprep.subr.mxu0 0.0
    %1523 = vmatpush2.msra.mxu0 0.0
    %1524 = vmatprep.subr.mxu0 0.0
    %1525 = vmatpush2.msra.mxu0 0.0
    %1526 = vmatprep.mubr.f32.mxu0 0.0
    %v1527 = vand.u32 %v1046, 4294901760
    %1528 = vmatmul.mubr.f32.gmra.mxu0 %v1527
    %v1529 = vpop.f32.mrf.mxu0
    %v1530 = vadd.f32 %v1455, %v1529
    %v1531 = vpop.f32.mrf.mxu0
    %1532 = vdwg.mxu0
    %v1533 = vadd.f32 %v1530, %v69
    %v1534 = vmax.f32 %v1533, 0.0
    %v1536 = vcombine.high %v1530, %v1530
    %v1538 = vunpack.c.l.s4 1966171168
    %v1539 = vunpack.c.0.s8 %v1538
    %v1540 = vlaneseq
    %v1541 = vshrl.u32 %v1540, 7
    %v1542 = vsub.s32 %v1539, %v1541
    %v1543 = vrot.slane %v1530, %v1542
    %v1545 = vunpack.c.l.s4 1966171168
    %v1546 = vunpack.c.0.s8 %v1545
    %v1547 = vlaneseq
    %v1548 = vshrl.u32 %v1547, 7
    %v1549 = vsub.s32 %v1546, %v1548
    %v1550 = vrot.slane %v1536, %v1549
    %v1551 = vcombine.high %v1543, %v1543
    %v1552 = vcombine.high %v1550, %v1550
    %v1554 = vunpack.c.l.s4 1966171168
    %v1555 = vunpack.c.0.s8 %v1554
    %v1556 = vlaneseq
    %v1557 = vshrl.u32 %v1556, 7
    %v1558 = vsub.s32 %v1555, %v1557
    %v1559 = vrot.slane %v1543, %v1558
    %v1561 = vunpack.c.l.s4 1966171168
    %v1562 = vunpack.c.0.s8 %v1561
    %v1563 = vlaneseq
    %v1564 = vshrl.u32 %v1563, 7
    %v1565 = vsub.s32 %v1562, %v1564
    %v1566 = vrot.slane %v1550, %v1565
    %v1568 = vunpack.c.l.s4 1966171168
    %v1569 = vunpack.c.0.s8 %v1568
    %v1570 = vlaneseq
    %v1571 = vshrl.u32 %v1570, 7
    %v1572 = vsub.s32 %v1569, %v1571
    %v1573 = vrot.slane %v1551, %v1572
    %v1575 = vunpack.c.l.s4 1966171168
    %v1576 = vunpack.c.0.s8 %v1575
    %v1577 = vlaneseq
    %v1578 = vshrl.u32 %v1577, 7
    %v1579 = vsub.s32 %v1576, %v1578
    %v1580 = vrot.slane %v1552, %v1579
    %v1581 = vcombine.high %v1559, %v1559
    %v1582 = vcombine.high %v1566, %v1566
    %v1583 = vcombine.high %v1573, %v1573
    %v1584 = vcombine.high %v1580, %v1580
    %v1585 = vlaneseq
    %v1586 = vshrl.u32 %v1585, 7
    %v1587 = vsub.s32 0, %v1586
    %v1588 = vrot.slane %v1559, %v1587
    %v1589 = vlaneseq
    %v1590 = vshrl.u32 %v1589, 7
    %v1591 = vsub.s32 0, %v1590
    %v1592 = vrot.slane %v1573, %v1591
    %v1593 = vlaneseq
    %v1594 = vshrl.u32 %v1593, 7
    %v1595 = vsub.s32 0, %v1594
    %v1596 = vrot.slane %v1581, %v1595
    %v1597 = vlaneseq
    %v1598 = vshrl.u32 %v1597, 7
    %v1599 = vsub.s32 0, %v1598
    %v1600 = vrot.slane %v1583, %v1599
    %v1601 = vlaneseq
    %v1602 = vshrl.u32 %v1601, 7
    %v1603 = vsub.s32 0, %v1602
    %v1604 = vrot.slane %v1566, %v1603
    %v1605 = vlaneseq
    %v1606 = vshrl.u32 %v1605, 7
    %v1607 = vsub.s32 0, %v1606
    %v1608 = vrot.slane %v1580, %v1607
    %v1609 = vlaneseq
    %v1610 = vshrl.u32 %v1609, 7
    %v1611 = vsub.s32 0, %v1610
    %v1612 = vrot.slane %v1582, %v1611
    %v1613 = vlaneseq
    %v1614 = vshrl.u32 %v1613, 7
    %v1615 = vsub.s32 0, %v1614
    %v1616 = vrot.slane %v1584, %v1615
    %1617 = vrot.lane.b32.xlu0 %v1588, 96
    %v1618 = vpop.permute.xlu0 %1617
    %1619 = vrot.lane.b32.xlu0 %v1592, 96
    %v1620 = vpop.permute.xlu0 %1619
    %1621 = vrot.lane.b32.xlu0 %v1596, 96
    %v1622 = vpop.permute.xlu0 %1621
    %1623 = vrot.lane.b32.xlu0 %v1600, 96
    %v1624 = vpop.permute.xlu0 %1623
    %1625 = vrot.lane.b32.xlu0 %v1604, 96
    %v1626 = vpop.permute.xlu0 %1625
    %1627 = vrot.lane.b32.xlu0 %v1608, 96
    %v1628 = vpop.permute.xlu0 %1627
    %1629 = vrot.lane.b32.xlu0 %v1612, 96
    %v1630 = vpop.permute.xlu0 %1629
    %1631 = vrot.lane.b32.xlu0 %v1616, 96
    %v1632 = vpop.permute.xlu0 %1631
    %v1641 = vadd.f32 %v111, %v1618
    %v1642 = vadd.f32 %v112, %v1620
    %v1643 = vadd.f32 %v113, %v1622
    %v1644 = vadd.f32 %v114, %v1624
    %v1645 = vadd.f32 %v115, %v1626
    %v1646 = vadd.f32 %v116, %v1628
    %v1647 = vadd.f32 %v117, %v1630
    %v1648 = vadd.f32 %v118, %v1632
    %v1649 = vadd.f32 %v1641, %v723
    %v1650 = vadd.f32 %v1642, %v723
    %v1651 = vadd.f32 %v1643, %v723
    %v1652 = vadd.f32 %v1644, %v723
    %v1653 = vadd.f32 %v1645, %v723
    %v1654 = vadd.f32 %v1646, %v723
    %v1655 = vadd.f32 %v1647, %v723
    %v1656 = vadd.f32 %v1648, %v723
    %v1657 = vmax.f32 %v1649, 0.0
    %v1658 = vmax.f32 %v1650, 0.0
    %v1659 = vmax.f32 %v1651, 0.0
    %v1660 = vmax.f32 %v1652, 0.0
    %v1661 = vmax.f32 %v1653, 0.0
    %v1662 = vmax.f32 %v1654, 0.0
    %v1663 = vmax.f32 %v1655, 0.0
    %v1664 = vmax.f32 %v1656, 0.0
    %v1665 = vsel %vm740, %v1657, -inf
    %v1666 = vrot.slane %v1665, 4
    %v1667 = vmax.f32 %v1665, %v1666
    %v1668 = vrot.slane %v1667, 2
    %v1669 = vmax.f32 %v1667, %v1668
    %v1670 = vrot.slane %v1669, 1
    %v1671 = vmax.f32 %v1669, %v1670
    %v1672 = vsel %vm740, %v1658, -inf
    %v1673 = vrot.slane %v1672, 4
    %v1674 = vmax.f32 %v1672, %v1673
    %v1675 = vrot.slane %v1674, 2
    %v1676 = vmax.f32 %v1674, %v1675
    %v1677 = vrot.slane %v1676, 1
    %v1678 = vmax.f32 %v1676, %v1677
    %v1679 = vsel %vm740, %v1659, -inf
    %v1680 = vrot.slane %v1679, 4
    %v1681 = vmax.f32 %v1679, %v1680
    %v1682 = vrot.slane %v1681, 2
    %v1683 = vmax.f32 %v1681, %v1682
    %v1684 = vrot.slane %v1683, 1
    %v1685 = vmax.f32 %v1683, %v1684
    %v1686 = vsel %vm740, %v1660, -inf
    %v1687 = vrot.slane %v1686, 4
    %v1688 = vmax.f32 %v1686, %v1687
    %v1689 = vrot.slane %v1688, 2
    %v1690 = vmax.f32 %v1688, %v1689
    %v1691 = vrot.slane %v1690, 1
    %v1692 = vmax.f32 %v1690, %v1691
    %v1693 = vsel %vm740, %v1661, -inf
    %v1694 = vrot.slane %v1693, 4
    %v1695 = vmax.f32 %v1693, %v1694
    %v1696 = vrot.slane %v1695, 2
    %v1697 = vmax.f32 %v1695, %v1696
    %v1698 = vrot.slane %v1697, 1
    %v1699 = vmax.f32 %v1697, %v1698
    %v1700 = vsel %vm740, %v1662, -inf
    %v1701 = vrot.slane %v1700, 4
    %v1702 = vmax.f32 %v1700, %v1701
    %v1703 = vrot.slane %v1702, 2
    %v1704 = vmax.f32 %v1702, %v1703
    %v1705 = vrot.slane %v1704, 1
    %v1706 = vmax.f32 %v1704, %v1705
    %v1707 = vsel %vm740, %v1663, -inf
    %v1708 = vrot.slane %v1707, 4
    %v1709 = vmax.f32 %v1707, %v1708
    %v1710 = vrot.slane %v1709, 2
    %v1711 = vmax.f32 %v1709, %v1710
    %v1712 = vrot.slane %v1711, 1
    %v1713 = vmax.f32 %v1711, %v1712
    %v1714 = vsel %vm740, %v1664, -inf
    %v1715 = vrot.slane %v1714, 4
    %v1716 = vmax.f32 %v1714, %v1715
    %v1717 = vrot.slane %v1716, 2
    %v1718 = vmax.f32 %v1716, %v1717
    %v1719 = vrot.slane %v1718, 1
    %v1720 = vmax.f32 %v1718, %v1719
    %v1721 = vsub.f32 %v1657, %v1671
    %v1722 = vsub.f32 %v1658, %v1678
    %v1723 = vsub.f32 %v1659, %v1685
    %v1724 = vsub.f32 %v1660, %v1692
    %v1725 = vsub.f32 %v1661, %v1699
    %v1726 = vsub.f32 %v1662, %v1706
    %v1727 = vsub.f32 %v1663, %v1713
    %v1728 = vsub.f32 %v1664, %v1720
    %v1729 = vmul.f32 %v1721, 1.442695
    %v1730 = vpow.pop %v1729
    %v1731 = vmul.f32 %v1722, 1.442695
    %v1732 = vpow.pop %v1731
    %v1733 = vmul.f32 %v1723, 1.442695
    %v1734 = vpow.pop %v1733
    %v1735 = vmul.f32 %v1724, 1.442695
    %v1736 = vpow.pop %v1735
    %v1737 = vmul.f32 %v1725, 1.442695
    %v1738 = vpow.pop %v1737
    %v1739 = vmul.f32 %v1726, 1.442695
    %v1740 = vpow.pop %v1739
    %v1741 = vmul.f32 %v1727, 1.442695
    %v1742 = vpow.pop %v1741
    %v1743 = vmul.f32 %v1728, 1.442695
    %v1744 = vpow.pop %v1743
    %v1745 = vmul.f32 %v1730, %v50
    %v1746 = vmul.f32 %v1732, %v51
    %v1747 = vmul.f32 %v1734, %v52
    %v1748 = vmul.f32 %v1736, %v53
    %v1749 = vmul.f32 %v1738, %v54
    %v1750 = vmul.f32 %v1740, %v55
    %v1751 = vmul.f32 %v1742, %v56
    %v1752 = vmul.f32 %v1744, %v57
    %v1753 = vsel %vm740, %v1745, 0.0
    %v1754 = vrot.slane %v1753, 4
    %v1755 = vadd.f32 %v1753, %v1754
    %v1756 = vrot.slane %v1755, 2
    %v1757 = vadd.f32 %v1755, %v1756
    %v1758 = vrot.slane %v1757, 1
    %v1759 = vadd.f32 %v1757, %v1758
    %v1760 = vsel %vm740, %v1746, 0.0
    %v1761 = vrot.slane %v1760, 4
    %v1762 = vadd.f32 %v1760, %v1761
    %v1763 = vrot.slane %v1762, 2
    %v1764 = vadd.f32 %v1762, %v1763
    %v1765 = vrot.slane %v1764, 1
    %v1766 = vadd.f32 %v1764, %v1765
    %v1767 = vsel %vm740, %v1747, 0.0
    %v1768 = vrot.slane %v1767, 4
    %v1769 = vadd.f32 %v1767, %v1768
    %v1770 = vrot.slane %v1769, 2
    %v1771 = vadd.f32 %v1769, %v1770
    %v1772 = vrot.slane %v1771, 1
    %v1773 = vadd.f32 %v1771, %v1772
    %v1774 = vsel %vm740, %v1748, 0.0
    %v1775 = vrot.slane %v1774, 4
    %v1776 = vadd.f32 %v1774, %v1775
    %v1777 = vrot.slane %v1776, 2
    %v1778 = vadd.f32 %v1776, %v1777
    %v1779 = vrot.slane %v1778, 1
    %v1780 = vadd.f32 %v1778, %v1779
    %v1781 = vsel %vm740, %v1749, 0.0
    %v1782 = vrot.slane %v1781, 4
    %v1783 = vadd.f32 %v1781, %v1782
    %v1784 = vrot.slane %v1783, 2
    %v1785 = vadd.f32 %v1783, %v1784
    %v1786 = vrot.slane %v1785, 1
    %v1787 = vadd.f32 %v1785, %v1786
    %v1788 = vsel %vm740, %v1750, 0.0
    %v1789 = vrot.slane %v1788, 4
    %v1790 = vadd.f32 %v1788, %v1789
    %v1791 = vrot.slane %v1790, 2
    %v1792 = vadd.f32 %v1790, %v1791
    %v1793 = vrot.slane %v1792, 1
    %v1794 = vadd.f32 %v1792, %v1793
    %v1795 = vsel %vm740, %v1751, 0.0
    %v1796 = vrot.slane %v1795, 4
    %v1797 = vadd.f32 %v1795, %v1796
    %v1798 = vrot.slane %v1797, 2
    %v1799 = vadd.f32 %v1797, %v1798
    %v1800 = vrot.slane %v1799, 1
    %v1801 = vadd.f32 %v1799, %v1800
    %v1802 = vsel %vm740, %v1752, 0.0
    %v1803 = vrot.slane %v1802, 4
    %v1804 = vadd.f32 %v1802, %v1803
    %v1805 = vrot.slane %v1804, 2
    %v1806 = vadd.f32 %v1804, %v1805
    %v1807 = vrot.slane %v1806, 1
    %v1808 = vadd.f32 %v1806, %v1807
    %v1809 = vadd.f32 %v1759, 1e-05
    %v1810 = vadd.f32 %v1766, 1e-05
    %v1811 = vadd.f32 %v1773, 1e-05
    %v1812 = vadd.f32 %v1780, 1e-05
    %v1813 = vadd.f32 %v1787, 1e-05
    %v1814 = vadd.f32 %v1794, 1e-05
    %v1815 = vadd.f32 %v1801, 1e-05
    %v1816 = vadd.f32 %v1808, 1e-05
    %v1817 = vrcp.pop %v1809
    %v1818 = vmul.f32 %v1745, %v1817
    %v1819 = vrcp.pop %v1810
    %v1820 = vmul.f32 %v1746, %v1819
    %v1821 = vrcp.pop %v1811
    %v1822 = vmul.f32 %v1747, %v1821
    %v1823 = vrcp.pop %v1812
    %v1824 = vmul.f32 %v1748, %v1823
    %v1825 = vrcp.pop %v1813
    %v1826 = vmul.f32 %v1749, %v1825
    %v1827 = vrcp.pop %v1814
    %v1828 = vmul.f32 %v1750, %v1827
    %v1829 = vrcp.pop %v1815
    %v1830 = vmul.f32 %v1751, %v1829
    %v1831 = vrcp.pop %v1816
    %v1832 = vmul.f32 %v1752, %v1831
    %v1833 = vmul.f32 %v50, %v1818
    %v1834 = vmul.f32 %v51, %v1820
    %v1835 = vmul.f32 %v52, %v1822
    %v1836 = vmul.f32 %v53, %v1824
    %v1837 = vmul.f32 %v54, %v1826
    %v1838 = vmul.f32 %v55, %v1828
    %v1839 = vmul.f32 %v56, %v1830
    %v1840 = vmul.f32 %v57, %v1832
    %1842 = vset.pattern.permute.xlu0 0
    %1843 = vperm.xlu0 %1842, %v1833
    %v1844 = vpop.permute.xlu0 %1843
    %1847 = vset.pattern.permute.xlu0 0
    %1848 = vperm.xlu0 %1847, %v1834
    %v1849 = vpop.permute.xlu0 %1848
    %1852 = vset.pattern.permute.xlu0 0
    %1853 = vperm.xlu0 %1852, %v1835
    %v1854 = vpop.permute.xlu0 %1853
    %1857 = vset.pattern.permute.xlu0 0
    %1858 = vperm.xlu0 %1857, %v1836
    %v1859 = vpop.permute.xlu0 %1858
    %1862 = vset.pattern.permute.xlu0 0
    %1863 = vperm.xlu0 %1862, %v1837
    %v1864 = vpop.permute.xlu0 %1863
    %1867 = vset.pattern.permute.xlu0 0
    %1868 = vperm.xlu0 %1867, %v1838
    %v1869 = vpop.permute.xlu0 %1868
    %1872 = vset.pattern.permute.xlu0 0
    %1873 = vperm.xlu0 %1872, %v1839
    %v1874 = vpop.permute.xlu0 %1873
    %1877 = vset.pattern.permute.xlu0 0
    %1878 = vperm.xlu0 %1877, %v1840
    %v1879 = vpop.permute.xlu0 %1878
    %v1881 = vmul.f32 %v42, %v1844
    %v1882 = vmul.f32 %v43, %v1849
    %v1883 = vmul.f32 %v44, %v1854
    %v1884 = vmul.f32 %v45, %v1859
    %v1885 = vmul.f32 %v46, %v1864
    %v1886 = vmul.f32 %v47, %v1869
    %v1887 = vmul.f32 %v48, %v1874
    %v1888 = vmul.f32 %v49, %v1879
    %v1889 = vsel %vm86, %v1881, 0.0
    %v1890 = vrot.slane %v1889, 4
    %v1891 = vadd.f32 %v1889, %v1890
    %v1892 = vrot.slane %v1891, 2
    %v1893 = vadd.f32 %v1891, %v1892
    %v1894 = vrot.slane %v1893, 1
    %v1895 = vadd.f32 %v1893, %v1894
    %v1896 = vsel %vm86, %v1882, 0.0
    %v1897 = vrot.slane %v1896, 4
    %v1898 = vadd.f32 %v1896, %v1897
    %v1899 = vrot.slane %v1898, 2
    %v1900 = vadd.f32 %v1898, %v1899
    %v1901 = vrot.slane %v1900, 1
    %v1902 = vadd.f32 %v1900, %v1901
    %v1903 = vsel %vm86, %v1883, 0.0
    %v1904 = vrot.slane %v1903, 4
    %v1905 = vadd.f32 %v1903, %v1904
    %v1906 = vrot.slane %v1905, 2
    %v1907 = vadd.f32 %v1905, %v1906
    %v1908 = vrot.slane %v1907, 1
    %v1909 = vadd.f32 %v1907, %v1908
    %v1910 = vsel %vm86, %v1884, 0.0
    %v1911 = vrot.slane %v1910, 4
    %v1912 = vadd.f32 %v1910, %v1911
    %v1913 = vrot.slane %v1912, 2
    %v1914 = vadd.f32 %v1912, %v1913
    %v1915 = vrot.slane %v1914, 1
    %v1916 = vadd.f32 %v1914, %v1915
    %v1917 = vsel %vm86, %v1885, 0.0
    %v1918 = vrot.slane %v1917, 4
    %v1919 = vadd.f32 %v1917, %v1918
    %v1920 = vrot.slane %v1919, 2
    %v1921 = vadd.f32 %v1919, %v1920
    %v1922 = vrot.slane %v1921, 1
    %v1923 = vadd.f32 %v1921, %v1922
    %v1924 = vsel %vm86, %v1886, 0.0
    %v1925 = vrot.slane %v1924, 4
    %v1926 = vadd.f32 %v1924, %v1925
    %v1927 = vrot.slane %v1926, 2
    %v1928 = vadd.f32 %v1926, %v1927
    %v1929 = vrot.slane %v1928, 1
    %v1930 = vadd.f32 %v1928, %v1929
    %v1931 = vsel %vm86, %v1887, 0.0
    %v1932 = vrot.slane %v1931, 4
    %v1933 = vadd.f32 %v1931, %v1932
    %v1934 = vrot.slane %v1933, 2
    %v1935 = vadd.f32 %v1933, %v1934
    %v1936 = vrot.slane %v1935, 1
    %v1937 = vadd.f32 %v1935, %v1936
    %v1938 = vsel %vm86, %v1888, 0.0
    %v1939 = vrot.slane %v1938, 4
    %v1940 = vadd.f32 %v1938, %v1939
    %v1941 = vrot.slane %v1940, 2
    %v1942 = vadd.f32 %v1940, %v1941
    %v1943 = vrot.slane %v1942, 1
    %v1944 = vadd.f32 %v1942, %v1943
    %v1953 = vsel %vm1029, %v1902, %v1895
    %v1954 = vsel %vm1031, %v1909, %v1953
    %v1955 = vsel %vm1033, %v1916, %v1954
    %v1956 = vsel %vm1035, %v1923, %v1955
    %v1957 = vsel %vm1037, %v1930, %v1956
    %v1958 = vsel %vm1039, %v1937, %v1957
    %v1959 = vsel %vm1041, %v1944, %v1958
    %v1961 = vadd.f32 %v1534, %v1959
    %v1963 = vsel %vm86, %v1961, 0
    %1965 = vmatprep.subr.mxu0 0.0
    %1966 = vmatpush1.msra.mxu0 0.0
    %1967 = vmatprep.subr.mxu0 0.0
    %1968 = vmatpush1.msra.mxu0 0.0
    %1969 = vmatprep.subr.mxu0 0.0
    %1970 = vmatpush1.msra.mxu0 0.0
    %1971 = vmatprep.subr.mxu0 0.0
    %1972 = vmatpush1.msra.mxu0 0.0
    %1973 = vmatprep.subr.mxu0 0.0
    %1974 = vmatpush1.msra.mxu0 0.0
    %1975 = vmatprep.subr.mxu0 0.0
    %1976 = vmatpush1.msra.mxu0 0.0
    %1977 = vmatprep.subr.mxu0 0.0
    %1978 = vmatpush1.msra.mxu0 0.0
    %1979 = vmatprep.subr.mxu0 0.0
    %1980 = vmatpush1.msra.mxu0 0.0
    %1981 = vmatprep.subr.mxu0 0.0
    %1982 = vmatpush1.msra.mxu0 0.0
    %1983 = vmatprep.subr.mxu0 0.0
    %1984 = vmatpush1.msra.mxu0 0.0
    %1985 = vmatprep.subr.mxu0 0.0
    %1986 = vmatpush1.msra.mxu0 0.0
    %1987 = vmatprep.subr.mxu0 0.0
    %1988 = vmatpush1.msra.mxu0 0.0
    %1989 = vmatprep.subr.mxu0 0.0
    %v1990 = vand.u32 %v62, 4294901760
    %1991 = vmatpush1.msra.mxu0 %v1990
    %1992 = vmatprep.subr.mxu0 0.0
    %v1993 = vand.u32 %v61, 4294901760
    %1994 = vmatpush1.msra.mxu0 %v1993
    %1995 = vmatprep.subr.mxu0 0.0
    %v1996 = vand.u32 %v60, 4294901760
    %1997 = vmatpush1.msra.mxu0 %v1996
    %1998 = vmatprep.subr.mxu0 0.0
    %v1999 = vand.u32 %v59, 4294901760
    %2000 = vmatpush1.msra.mxu0 %v1999
    %2001 = vmatprep.subr.mxu0 0.0
    %2002 = vmatpush2.msra.mxu0 0.0
    %2003 = vmatprep.subr.mxu0 0.0
    %2004 = vmatpush2.msra.mxu0 0.0
    %2005 = vmatprep.subr.mxu0 0.0
    %2006 = vmatpush2.msra.mxu0 0.0
    %2007 = vmatprep.subr.mxu0 0.0
    %2008 = vmatpush2.msra.mxu0 0.0
    %2009 = vmatprep.subr.mxu0 0.0
    %2010 = vmatpush2.msra.mxu0 0.0
    %2011 = vmatprep.subr.mxu0 0.0
    %2012 = vmatpush2.msra.mxu0 0.0
    %2013 = vmatprep.subr.mxu0 0.0
    %2014 = vmatpush2.msra.mxu0 0.0
    %2015 = vmatprep.subr.mxu0 0.0
    %2016 = vmatpush2.msra.mxu0 0.0
    %2017 = vmatprep.subr.mxu0 0.0
    %2018 = vmatpush2.msra.mxu0 0.0
    %2019 = vmatprep.subr.mxu0 0.0
    %2020 = vmatpush2.msra.mxu0 0.0
    %2021 = vmatprep.subr.mxu0 0.0
    %2022 = vmatpush2.msra.mxu0 0.0
    %2023 = vmatprep.subr.mxu0 0.0
    %2024 = vmatpush2.msra.mxu0 0.0
    %2025 = vmatprep.subr.mxu0 0.0
    %2026 = vmatpush2.msra.mxu0 0.0
    %2027 = vmatprep.subr.mxu0 0.0
    %2028 = vmatpush2.msra.mxu0 0.0
    %2029 = vmatprep.subr.mxu0 0.0
    %2030 = vmatpush2.msra.mxu0 0.0
    %2031 = vmatprep.subr.mxu0 0.0
    %2032 = vmatpush2.msra.mxu0 0.0
    %2033 = vmatprep.mubr.f32.mxu0 0.0
    %v2034 = vand.u32 %v1963, 4294901760
    %v2035 = vsub.f32 %v1963, %v2034
    %v2036 = vand.u32 %v2035, 4294901760
    %v2037 = vsub.f32 %v2035, %v2036
    %v2038 = vand.u32 %v2037, 4294901760
    %2039 = vmatmul.mubr.f32.gmra.mxu0 %v2038
    %v2040 = vpop.f32.mrf.mxu0
    %v2041 = vadd.f32 0.0, %v2040
    %v2042 = vpop.f32.mrf.mxu0
    %2043 = vdwg.mxu0
    %2044 = vmatprep.subr.mxu0 0.0
    %2045 = vmatpush1.msra.mxu0 0.0
    %2046 = vmatprep.subr.mxu0 0.0
    %2047 = vmatpush1.msra.mxu0 0.0
    %2048 = vmatprep.subr.mxu0 0.0
    %2049 = vmatpush1.msra.mxu0 0.0
    %2050 = vmatprep.subr.mxu0 0.0
    %2051 = vmatpush1.msra.mxu0 0.0
    %2052 = vmatprep.subr.mxu0 0.0
    %2053 = vmatpush1.msra.mxu0 0.0
    %2054 = vmatprep.subr.mxu0 0.0
    %2055 = vmatpush1.msra.mxu0 0.0
    %2056 = vmatprep.subr.mxu0 0.0
    %2057 = vmatpush1.msra.mxu0 0.0
    %2058 = vmatprep.subr.mxu0 0.0
    %2059 = vmatpush1.msra.mxu0 0.0
    %2060 = vmatprep.subr.mxu0 0.0
    %2061 = vmatpush1.msra.mxu0 0.0
    %2062 = vmatprep.subr.mxu0 0.0
    %2063 = vmatpush1.msra.mxu0 0.0
    %2064 = vmatprep.subr.mxu0 0.0
    %2065 = vmatpush1.msra.mxu0 0.0
    %2066 = vmatprep.subr.mxu0 0.0
    %2067 = vmatpush1.msra.mxu0 0.0
    %2068 = vmatprep.subr.mxu0 0.0
    %v2069 = vand.u32 %v62, 4294901760
    %v2070 = vsub.f32 %v62, %v2069
    %v2071 = vand.u32 %v2070, 4294901760
    %v2072 = vsub.f32 %v2070, %v2071
    %v2073 = vand.u32 %v2072, 4294901760
    %2074 = vmatpush1.msra.mxu0 %v2073
    %2075 = vmatprep.subr.mxu0 0.0
    %v2076 = vand.u32 %v61, 4294901760
    %v2077 = vsub.f32 %v61, %v2076
    %v2078 = vand.u32 %v2077, 4294901760
    %v2079 = vsub.f32 %v2077, %v2078
    %v2080 = vand.u32 %v2079, 4294901760
    %2081 = vmatpush1.msra.mxu0 %v2080
    %2082 = vmatprep.subr.mxu0 0.0
    %v2083 = vand.u32 %v60, 4294901760
    %v2084 = vsub.f32 %v60, %v2083
    %v2085 = vand.u32 %v2084, 4294901760
    %v2086 = vsub.f32 %v2084, %v2085
    %v2087 = vand.u32 %v2086, 4294901760
    %2088 = vmatpush1.msra.mxu0 %v2087
    %2089 = vmatprep.subr.mxu0 0.0
    %v2090 = vand.u32 %v59, 4294901760
    %v2091 = vsub.f32 %v59, %v2090
    %v2092 = vand.u32 %v2091, 4294901760
    %v2093 = vsub.f32 %v2091, %v2092
    %v2094 = vand.u32 %v2093, 4294901760
    %2095 = vmatpush1.msra.mxu0 %v2094
    %2096 = vmatprep.subr.mxu0 0.0
    %2097 = vmatpush2.msra.mxu0 0.0
    %2098 = vmatprep.subr.mxu0 0.0
    %2099 = vmatpush2.msra.mxu0 0.0
    %2100 = vmatprep.subr.mxu0 0.0
    %2101 = vmatpush2.msra.mxu0 0.0
    %2102 = vmatprep.subr.mxu0 0.0
    %2103 = vmatpush2.msra.mxu0 0.0
    %2104 = vmatprep.subr.mxu0 0.0
    %2105 = vmatpush2.msra.mxu0 0.0
    %2106 = vmatprep.subr.mxu0 0.0
    %2107 = vmatpush2.msra.mxu0 0.0
    %2108 = vmatprep.subr.mxu0 0.0
    %2109 = vmatpush2.msra.mxu0 0.0
    %2110 = vmatprep.subr.mxu0 0.0
    %2111 = vmatpush2.msra.mxu0 0.0
    %2112 = vmatprep.subr.mxu0 0.0
    %2113 = vmatpush2.msra.mxu0 0.0
    %2114 = vmatprep.subr.mxu0 0.0
    %2115 = vmatpush2.msra.mxu0 0.0
    %2116 = vmatprep.subr.mxu0 0.0
    %2117 = vmatpush2.msra.mxu0 0.0
    %2118 = vmatprep.subr.mxu0 0.0
    %2119 = vmatpush2.msra.mxu0 0.0
    %2120 = vmatprep.subr.mxu0 0.0
    %2121 = vmatpush2.msra.mxu0 0.0
    %2122 = vmatprep.subr.mxu0 0.0
    %2123 = vmatpush2.msra.mxu0 0.0
    %2124 = vmatprep.subr.mxu0 0.0
    %2125 = vmatpush2.msra.mxu0 0.0
    %2126 = vmatprep.subr.mxu0 0.0
    %2127 = vmatpush2.msra.mxu0 0.0
    %2128 = vmatprep.mubr.f32.mxu0 0.0
    %v2129 = vand.u32 %v1963, 4294901760
    %2130 = vmatmul.mubr.f32.gmra.mxu0 %v2129
    %v2131 = vpop.f32.mrf.mxu0
    %v2132 = vadd.f32 %v2041, %v2131
    %v2133 = vpop.f32.mrf.mxu0
    %2134 = vdwg.mxu0
    %2135 = vmatprep.subr.mxu0 0.0
    %2136 = vmatpush1.msra.mxu0 0.0
    %2137 = vmatprep.subr.mxu0 0.0
    %2138 = vmatpush1.msra.mxu0 0.0
    %2139 = vmatprep.subr.mxu0 0.0
    %2140 = vmatpush1.msra.mxu0 0.0
    %2141 = vmatprep.subr.mxu0 0.0
    %2142 = vmatpush1.msra.mxu0 0.0
    %2143 = vmatprep.subr.mxu0 0.0
    %2144 = vmatpush1.msra.mxu0 0.0
    %2145 = vmatprep.subr.mxu0 0.0
    %2146 = vmatpush1.msra.mxu0 0.0
    %2147 = vmatprep.subr.mxu0 0.0
    %2148 = vmatpush1.msra.mxu0 0.0
    %2149 = vmatprep.subr.mxu0 0.0
    %2150 = vmatpush1.msra.mxu0 0.0
    %2151 = vmatprep.subr.mxu0 0.0
    %2152 = vmatpush1.msra.mxu0 0.0
    %2153 = vmatprep.subr.mxu0 0.0
    %2154 = vmatpush1.msra.mxu0 0.0
    %2155 = vmatprep.subr.mxu0 0.0
    %2156 = vmatpush1.msra.mxu0 0.0
    %2157 = vmatprep.subr.mxu0 0.0
    %2158 = vmatpush1.msra.mxu0 0.0
    %2159 = vmatprep.subr.mxu0 0.0
    %v2160 = vand.u32 %v62, 4294901760
    %v2161 = vsub.f32 %v62, %v2160
    %2162 = vmatpush1.msra.mxu0 %v2161
    %2163 = vmatprep.subr.mxu0 0.0
    %v2164 = vand.u32 %v61, 4294901760
    %v2165 = vsub.f32 %v61, %v2164
    %2166 = vmatpush1.msra.mxu0 %v2165
    %2167 = vmatprep.subr.mxu0 0.0
    %v2168 = vand.u32 %v60, 4294901760
    %v2169 = vsub.f32 %v60, %v2168
    %2170 = vmatpush1.msra.mxu0 %v2169
    %2171 = vmatprep.subr.mxu0 0.0
    %v2172 = vand.u32 %v59, 4294901760
    %v2173 = vsub.f32 %v59, %v2172
    %2174 = vmatpush1.msra.mxu0 %v2173
    %2175 = vmatprep.subr.mxu0 0.0
    %2176 = vmatpush2.msra.mxu0 0.0
    %2177 = vmatprep.subr.mxu0 0.0
    %2178 = vmatpush2.msra.mxu0 0.0
    %2179 = vmatprep.subr.mxu0 0.0
    %2180 = vmatpush2.msra.mxu0 0.0
    %2181 = vmatprep.subr.mxu0 0.0
    %2182 = vmatpush2.msra.mxu0 0.0
    %2183 = vmatprep.subr.mxu0 0.0
    %2184 = vmatpush2.msra.mxu0 0.0
    %2185 = vmatprep.subr.mxu0 0.0
    %2186 = vmatpush2.msra.mxu0 0.0
    %2187 = vmatprep.subr.mxu0 0.0
    %2188 = vmatpush2.msra.mxu0 0.0
    %2189 = vmatprep.subr.mxu0 0.0
    %2190 = vmatpush2.msra.mxu0 0.0
    %2191 = vmatprep.subr.mxu0 0.0
    %2192 = vmatpush2.msra.mxu0 0.0
    %2193 = vmatprep.subr.mxu0 0.0
    %2194 = vmatpush2.msra.mxu0 0.0
    %2195 = vmatprep.subr.mxu0 0.0
    %2196 = vmatpush2.msra.mxu0 0.0
    %2197 = vmatprep.subr.mxu0 0.0
    %2198 = vmatpush2.msra.mxu0 0.0
    %2199 = vmatprep.subr.mxu0 0.0
    %2200 = vmatpush2.msra.mxu0 0.0
    %2201 = vmatprep.subr.mxu0 0.0
    %2202 = vmatpush2.msra.mxu0 0.0
    %2203 = vmatprep.subr.mxu0 0.0
    %2204 = vmatpush2.msra.mxu0 0.0
    %2205 = vmatprep.subr.mxu0 0.0
    %2206 = vmatpush2.msra.mxu0 0.0
    %2207 = vmatprep.mubr.f32.mxu0 0.0
    %v2208 = vand.u32 %v1963, 4294901760
    %v2209 = vsub.f32 %v1963, %v2208
    %2210 = vmatmul.mubr.f32.gmra.mxu0 %v2209
    %v2211 = vpop.f32.mrf.mxu0
    %v2212 = vadd.f32 %v2132, %v2211
    %v2213 = vpop.f32.mrf.mxu0
    %2214 = vdwg.mxu0
    %2215 = vmatprep.subr.mxu0 0.0
    %2216 = vmatpush1.msra.mxu0 0.0
    %2217 = vmatprep.subr.mxu0 0.0
    %2218 = vmatpush1.msra.mxu0 0.0
    %2219 = vmatprep.subr.mxu0 0.0
    %2220 = vmatpush1.msra.mxu0 0.0
    %2221 = vmatprep.subr.mxu0 0.0
    %2222 = vmatpush1.msra.mxu0 0.0
    %2223 = vmatprep.subr.mxu0 0.0
    %2224 = vmatpush1.msra.mxu0 0.0
    %2225 = vmatprep.subr.mxu0 0.0
    %2226 = vmatpush1.msra.mxu0 0.0
    %2227 = vmatprep.subr.mxu0 0.0
    %2228 = vmatpush1.msra.mxu0 0.0
    %2229 = vmatprep.subr.mxu0 0.0
    %2230 = vmatpush1.msra.mxu0 0.0
    %2231 = vmatprep.subr.mxu0 0.0
    %2232 = vmatpush1.msra.mxu0 0.0
    %2233 = vmatprep.subr.mxu0 0.0
    %2234 = vmatpush1.msra.mxu0 0.0
    %2235 = vmatprep.subr.mxu0 0.0
    %2236 = vmatpush1.msra.mxu0 0.0
    %2237 = vmatprep.subr.mxu0 0.0
    %2238 = vmatpush1.msra.mxu0 0.0
    %2239 = vmatprep.subr.mxu0 0.0
    %v2240 = vand.u32 %v62, 4294901760
    %2241 = vmatpush1.msra.mxu0 %v2240
    %2242 = vmatprep.subr.mxu0 0.0
    %v2243 = vand.u32 %v61, 4294901760
    %2244 = vmatpush1.msra.mxu0 %v2243
    %2245 = vmatprep.subr.mxu0 0.0
    %v2246 = vand.u32 %v60, 4294901760
    %2247 = vmatpush1.msra.mxu0 %v2246
    %2248 = vmatprep.subr.mxu0 0.0
    %v2249 = vand.u32 %v59, 4294901760
    %2250 = vmatpush1.msra.mxu0 %v2249
    %2251 = vmatprep.subr.mxu0 0.0
    %2252 = vmatpush2.msra.mxu0 0.0
    %2253 = vmatprep.subr.mxu0 0.0
    %2254 = vmatpush2.msra.mxu0 0.0
    %2255 = vmatprep.subr.mxu0 0.0
    %2256 = vmatpush2.msra.mxu0 0.0
    %2257 = vmatprep.subr.mxu0 0.0
    %2258 = vmatpush2.msra.mxu0 0.0
    %2259 = vmatprep.subr.mxu0 0.0
    %2260 = vmatpush2.msra.mxu0 0.0
    %2261 = vmatprep.subr.mxu0 0.0
    %2262 = vmatpush2.msra.mxu0 0.0
    %2263 = vmatprep.subr.mxu0 0.0
    %2264 = vmatpush2.msra.mxu0 0.0
    %2265 = vmatprep.subr.mxu0 0.0
    %2266 = vmatpush2.msra.mxu0 0.0
    %2267 = vmatprep.subr.mxu0 0.0
    %2268 = vmatpush2.msra.mxu0 0.0
    %2269 = vmatprep.subr.mxu0 0.0
    %2270 = vmatpush2.msra.mxu0 0.0
    %2271 = vmatprep.subr.mxu0 0.0
    %2272 = vmatpush2.msra.mxu0 0.0
    %2273 = vmatprep.subr.mxu0 0.0
    %2274 = vmatpush2.msra.mxu0 0.0
    %2275 = vmatprep.subr.mxu0 0.0
    %2276 = vmatpush2.msra.mxu0 0.0
    %2277 = vmatprep.subr.mxu0 0.0
    %2278 = vmatpush2.msra.mxu0 0.0
    %2279 = vmatprep.subr.mxu0 0.0
    %2280 = vmatpush2.msra.mxu0 0.0
    %2281 = vmatprep.subr.mxu0 0.0
    %2282 = vmatpush2.msra.mxu0 0.0
    %2283 = vmatprep.mubr.f32.mxu0 0.0
    %v2284 = vand.u32 %v1963, 4294901760
    %v2285 = vsub.f32 %v1963, %v2284
    %v2286 = vand.u32 %v2285, 4294901760
    %2287 = vmatmul.mubr.f32.gmra.mxu0 %v2286
    %v2288 = vpop.f32.mrf.mxu0
    %v2289 = vadd.f32 %v2212, %v2288
    %v2290 = vpop.f32.mrf.mxu0
    %2291 = vdwg.mxu0
    %2292 = vmatprep.subr.mxu0 0.0
    %2293 = vmatpush1.msra.mxu0 0.0
    %2294 = vmatprep.subr.mxu0 0.0
    %2295 = vmatpush1.msra.mxu0 0.0
    %2296 = vmatprep.subr.mxu0 0.0
    %2297 = vmatpush1.msra.mxu0 0.0
    %2298 = vmatprep.subr.mxu0 0.0
    %2299 = vmatpush1.msra.mxu0 0.0
    %2300 = vmatprep.subr.mxu0 0.0
    %2301 = vmatpush1.msra.mxu0 0.0
    %2302 = vmatprep.subr.mxu0 0.0
    %2303 = vmatpush1.msra.mxu0 0.0
    %2304 = vmatprep.subr.mxu0 0.0
    %2305 = vmatpush1.msra.mxu0 0.0
    %2306 = vmatprep.subr.mxu0 0.0
    %2307 = vmatpush1.msra.mxu0 0.0
    %2308 = vmatprep.subr.mxu0 0.0
    %2309 = vmatpush1.msra.mxu0 0.0
    %2310 = vmatprep.subr.mxu0 0.0
    %2311 = vmatpush1.msra.mxu0 0.0
    %2312 = vmatprep.subr.mxu0 0.0
    %2313 = vmatpush1.msra.mxu0 0.0
    %2314 = vmatprep.subr.mxu0 0.0
    %2315 = vmatpush1.msra.mxu0 0.0
    %2316 = vmatprep.subr.mxu0 0.0
    %v2317 = vand.u32 %v62, 4294901760
    %v2318 = vsub.f32 %v62, %v2317
    %v2319 = vand.u32 %v2318, 4294901760
    %2320 = vmatpush1.msra.mxu0 %v2319
    %2321 = vmatprep.subr.mxu0 0.0
    %v2322 = vand.u32 %v61, 4294901760
    %v2323 = vsub.f32 %v61, %v2322
    %v2324 = vand.u32 %v2323, 4294901760
    %2325 = vmatpush1.msra.mxu0 %v2324
    %2326 = vmatprep.subr.mxu0 0.0
    %v2327 = vand.u32 %v60, 4294901760
    %v2328 = vsub.f32 %v60, %v2327
    %v2329 = vand.u32 %v2328, 4294901760
    %2330 = vmatpush1.msra.mxu0 %v2329
    %2331 = vmatprep.subr.mxu0 0.0
    %v2332 = vand.u32 %v59, 4294901760
    %v2333 = vsub.f32 %v59, %v2332
    %v2334 = vand.u32 %v2333, 4294901760
    %2335 = vmatpush1.msra.mxu0 %v2334
    %2336 = vmatprep.subr.mxu0 0.0
    %2337 = vmatpush2.msra.mxu0 0.0
    %2338 = vmatprep.subr.mxu0 0.0
    %2339 = vmatpush2.msra.mxu0 0.0
    %2340 = vmatprep.subr.mxu0 0.0
    %2341 = vmatpush2.msra.mxu0 0.0
    %2342 = vmatprep.subr.mxu0 0.0
    %2343 = vmatpush2.msra.mxu0 0.0
    %2344 = vmatprep.subr.mxu0 0.0
    %2345 = vmatpush2.msra.mxu0 0.0
    %2346 = vmatprep.subr.mxu0 0.0
    %2347 = vmatpush2.msra.mxu0 0.0
    %2348 = vmatprep.subr.mxu0 0.0
    %2349 = vmatpush2.msra.mxu0 0.0
    %2350 = vmatprep.subr.mxu0 0.0
    %2351 = vmatpush2.msra.mxu0 0.0
    %2352 = vmatprep.subr.mxu0 0.0
    %2353 = vmatpush2.msra.mxu0 0.0
    %2354 = vmatprep.subr.mxu0 0.0
    %2355 = vmatpush2.msra.mxu0 0.0
    %2356 = vmatprep.subr.mxu0 0.0
    %2357 = vmatpush2.msra.mxu0 0.0
    %2358 = vmatprep.subr.mxu0 0.0
    %2359 = vmatpush2.msra.mxu0 0.0
    %2360 = vmatprep.subr.mxu0 0.0
    %2361 = vmatpush2.msra.mxu0 0.0
    %2362 = vmatprep.subr.mxu0 0.0
    %2363 = vmatpush2.msra.mxu0 0.0
    %2364 = vmatprep.subr.mxu0 0.0
    %2365 = vmatpush2.msra.mxu0 0.0
    %2366 = vmatprep.subr.mxu0 0.0
    %2367 = vmatpush2.msra.mxu0 0.0
    %2368 = vmatprep.mubr.f32.mxu0 0.0
    %v2369 = vand.u32 %v1963, 4294901760
    %2370 = vmatmul.mubr.f32.gmra.mxu0 %v2369
    %v2371 = vpop.f32.mrf.mxu0
    %v2372 = vadd.f32 %v2289, %v2371
    %v2373 = vpop.f32.mrf.mxu0
    %2374 = vdwg.mxu0
    %2375 = vmatprep.subr.mxu0 0.0
    %2376 = vmatpush1.msra.mxu0 0.0
    %2377 = vmatprep.subr.mxu0 0.0
    %2378 = vmatpush1.msra.mxu0 0.0
    %2379 = vmatprep.subr.mxu0 0.0
    %2380 = vmatpush1.msra.mxu0 0.0
    %2381 = vmatprep.subr.mxu0 0.0
    %2382 = vmatpush1.msra.mxu0 0.0
    %2383 = vmatprep.subr.mxu0 0.0
    %2384 = vmatpush1.msra.mxu0 0.0
    %2385 = vmatprep.subr.mxu0 0.0
    %2386 = vmatpush1.msra.mxu0 0.0
    %2387 = vmatprep.subr.mxu0 0.0
    %2388 = vmatpush1.msra.mxu0 0.0
    %2389 = vmatprep.subr.mxu0 0.0
    %2390 = vmatpush1.msra.mxu0 0.0
    %2391 = vmatprep.subr.mxu0 0.0
    %2392 = vmatpush1.msra.mxu0 0.0
    %2393 = vmatprep.subr.mxu0 0.0
    %2394 = vmatpush1.msra.mxu0 0.0
    %2395 = vmatprep.subr.mxu0 0.0
    %2396 = vmatpush1.msra.mxu0 0.0
    %2397 = vmatprep.subr.mxu0 0.0
    %2398 = vmatpush1.msra.mxu0 0.0
    %2399 = vmatprep.subr.mxu0 0.0
    %v2400 = vand.u32 %v62, 4294901760
    %2401 = vmatpush1.msra.mxu0 %v2400
    %2402 = vmatprep.subr.mxu0 0.0
    %v2403 = vand.u32 %v61, 4294901760
    %2404 = vmatpush1.msra.mxu0 %v2403
    %2405 = vmatprep.subr.mxu0 0.0
    %v2406 = vand.u32 %v60, 4294901760
    %2407 = vmatpush1.msra.mxu0 %v2406
    %2408 = vmatprep.subr.mxu0 0.0
    %v2409 = vand.u32 %v59, 4294901760
    %2410 = vmatpush1.msra.mxu0 %v2409
    %2411 = vmatprep.subr.mxu0 0.0
    %2412 = vmatpush2.msra.mxu0 0.0
    %2413 = vmatprep.subr.mxu0 0.0
    %2414 = vmatpush2.msra.mxu0 0.0
    %2415 = vmatprep.subr.mxu0 0.0
    %2416 = vmatpush2.msra.mxu0 0.0
    %2417 = vmatprep.subr.mxu0 0.0
    %2418 = vmatpush2.msra.mxu0 0.0
    %2419 = vmatprep.subr.mxu0 0.0
    %2420 = vmatpush2.msra.mxu0 0.0
    %2421 = vmatprep.subr.mxu0 0.0
    %2422 = vmatpush2.msra.mxu0 0.0
    %2423 = vmatprep.subr.mxu0 0.0
    %2424 = vmatpush2.msra.mxu0 0.0
    %2425 = vmatprep.subr.mxu0 0.0
    %2426 = vmatpush2.msra.mxu0 0.0
    %2427 = vmatprep.subr.mxu0 0.0
    %2428 = vmatpush2.msra.mxu0 0.0
    %2429 = vmatprep.subr.mxu0 0.0
    %2430 = vmatpush2.msra.mxu0 0.0
    %2431 = vmatprep.subr.mxu0 0.0
    %2432 = vmatpush2.msra.mxu0 0.0
    %2433 = vmatprep.subr.mxu0 0.0
    %2434 = vmatpush2.msra.mxu0 0.0
    %2435 = vmatprep.subr.mxu0 0.0
    %2436 = vmatpush2.msra.mxu0 0.0
    %2437 = vmatprep.subr.mxu0 0.0
    %2438 = vmatpush2.msra.mxu0 0.0
    %2439 = vmatprep.subr.mxu0 0.0
    %2440 = vmatpush2.msra.mxu0 0.0
    %2441 = vmatprep.subr.mxu0 0.0
    %2442 = vmatpush2.msra.mxu0 0.0
    %2443 = vmatprep.mubr.f32.mxu0 0.0
    %v2444 = vand.u32 %v1963, 4294901760
    %2445 = vmatmul.mubr.f32.gmra.mxu0 %v2444
    %v2446 = vpop.f32.mrf.mxu0
    %v2447 = vadd.f32 %v2372, %v2446
    %v2448 = vpop.f32.mrf.mxu0
    %2449 = vdwg.mxu0
    %v2450 = vadd.f32 %v2447, %v69
    %v2451 = vmax.f32 %v2450, 0.0
    %v2453 = vcombine.high %v2447, %v2447
    %v2455 = vunpack.c.l.s4 1966171168
    %v2456 = vunpack.c.0.s8 %v2455
    %v2457 = vlaneseq
    %v2458 = vshrl.u32 %v2457, 7
    %v2459 = vsub.s32 %v2456, %v2458
    %v2460 = vrot.slane %v2447, %v2459
    %v2462 = vunpack.c.l.s4 1966171168
    %v2463 = vunpack.c.0.s8 %v2462
    %v2464 = vlaneseq
    %v2465 = vshrl.u32 %v2464, 7
    %v2466 = vsub.s32 %v2463, %v2465
    %v2467 = vrot.slane %v2453, %v2466
    %v2468 = vcombine.high %v2460, %v2460
    %v2469 = vcombine.high %v2467, %v2467
    %v2471 = vunpack.c.l.s4 1966171168
    %v2472 = vunpack.c.0.s8 %v2471
    %v2473 = vlaneseq
    %v2474 = vshrl.u32 %v2473, 7
    %v2475 = vsub.s32 %v2472, %v2474
    %v2476 = vrot.slane %v2460, %v2475
    %v2478 = vunpack.c.l.s4 1966171168
    %v2479 = vunpack.c.0.s8 %v2478
    %v2480 = vlaneseq
    %v2481 = vshrl.u32 %v2480, 7
    %v2482 = vsub.s32 %v2479, %v2481
    %v2483 = vrot.slane %v2467, %v2482
    %v2485 = vunpack.c.l.s4 1966171168
    %v2486 = vunpack.c.0.s8 %v2485
    %v2487 = vlaneseq
    %v2488 = vshrl.u32 %v2487, 7
    %v2489 = vsub.s32 %v2486, %v2488
    %v2490 = vrot.slane %v2468, %v2489
    %v2492 = vunpack.c.l.s4 1966171168
    %v2493 = vunpack.c.0.s8 %v2492
    %v2494 = vlaneseq
    %v2495 = vshrl.u32 %v2494, 7
    %v2496 = vsub.s32 %v2493, %v2495
    %v2497 = vrot.slane %v2469, %v2496
    %v2498 = vcombine.high %v2476, %v2476
    %v2499 = vcombine.high %v2483, %v2483
    %v2500 = vcombine.high %v2490, %v2490
    %v2501 = vcombine.high %v2497, %v2497
    %v2502 = vlaneseq
    %v2503 = vshrl.u32 %v2502, 7
    %v2504 = vsub.s32 0, %v2503
    %v2505 = vrot.slane %v2476, %v2504
    %v2506 = vlaneseq
    %v2507 = vshrl.u32 %v2506, 7
    %v2508 = vsub.s32 0, %v2507
    %v2509 = vrot.slane %v2490, %v2508
    %v2510 = vlaneseq
    %v2511 = vshrl.u32 %v2510, 7
    %v2512 = vsub.s32 0, %v2511
    %v2513 = vrot.slane %v2498, %v2512
    %v2514 = vlaneseq
    %v2515 = vshrl.u32 %v2514, 7
    %v2516 = vsub.s32 0, %v2515
    %v2517 = vrot.slane %v2500, %v2516
    %v2518 = vlaneseq
    %v2519 = vshrl.u32 %v2518, 7
    %v2520 = vsub.s32 0, %v2519
    %v2521 = vrot.slane %v2483, %v2520
    %v2522 = vlaneseq
    %v2523 = vshrl.u32 %v2522, 7
    %v2524 = vsub.s32 0, %v2523
    %v2525 = vrot.slane %v2497, %v2524
    %v2526 = vlaneseq
    %v2527 = vshrl.u32 %v2526, 7
    %v2528 = vsub.s32 0, %v2527
    %v2529 = vrot.slane %v2499, %v2528
    %v2530 = vlaneseq
    %v2531 = vshrl.u32 %v2530, 7
    %v2532 = vsub.s32 0, %v2531
    %v2533 = vrot.slane %v2501, %v2532
    %2534 = vrot.lane.b32.xlu0 %v2505, 96
    %v2535 = vpop.permute.xlu0 %2534
    %2536 = vrot.lane.b32.xlu0 %v2509, 96
    %v2537 = vpop.permute.xlu0 %2536
    %2538 = vrot.lane.b32.xlu0 %v2513, 96
    %v2539 = vpop.permute.xlu0 %2538
    %2540 = vrot.lane.b32.xlu0 %v2517, 96
    %v2541 = vpop.permute.xlu0 %2540
    %2542 = vrot.lane.b32.xlu0 %v2521, 96
    %v2543 = vpop.permute.xlu0 %2542
    %2544 = vrot.lane.b32.xlu0 %v2525, 96
    %v2545 = vpop.permute.xlu0 %2544
    %2546 = vrot.lane.b32.xlu0 %v2529, 96
    %v2547 = vpop.permute.xlu0 %2546
    %2548 = vrot.lane.b32.xlu0 %v2533, 96
    %v2549 = vpop.permute.xlu0 %2548
    %v2558 = vadd.f32 %v111, %v2535
    %v2559 = vadd.f32 %v112, %v2537
    %v2560 = vadd.f32 %v113, %v2539
    %v2561 = vadd.f32 %v114, %v2541
    %v2562 = vadd.f32 %v115, %v2543
    %v2563 = vadd.f32 %v116, %v2545
    %v2564 = vadd.f32 %v117, %v2547
    %v2565 = vadd.f32 %v118, %v2549
    %v2566 = vadd.f32 %v2558, %v723
    %v2567 = vadd.f32 %v2559, %v723
    %v2568 = vadd.f32 %v2560, %v723
    %v2569 = vadd.f32 %v2561, %v723
    %v2570 = vadd.f32 %v2562, %v723
    %v2571 = vadd.f32 %v2563, %v723
    %v2572 = vadd.f32 %v2564, %v723
    %v2573 = vadd.f32 %v2565, %v723
    %v2574 = vmax.f32 %v2566, 0.0
    %v2575 = vmax.f32 %v2567, 0.0
    %v2576 = vmax.f32 %v2568, 0.0
    %v2577 = vmax.f32 %v2569, 0.0
    %v2578 = vmax.f32 %v2570, 0.0
    %v2579 = vmax.f32 %v2571, 0.0
    %v2580 = vmax.f32 %v2572, 0.0
    %v2581 = vmax.f32 %v2573, 0.0
    %v2582 = vsel %vm740, %v2574, -inf
    %v2583 = vrot.slane %v2582, 4
    %v2584 = vmax.f32 %v2582, %v2583
    %v2585 = vrot.slane %v2584, 2
    %v2586 = vmax.f32 %v2584, %v2585
    %v2587 = vrot.slane %v2586, 1
    %v2588 = vmax.f32 %v2586, %v2587
    %v2589 = vsel %vm740, %v2575, -inf
    %v2590 = vrot.slane %v2589, 4
    %v2591 = vmax.f32 %v2589, %v2590
    %v2592 = vrot.slane %v2591, 2
    %v2593 = vmax.f32 %v2591, %v2592
    %v2594 = vrot.slane %v2593, 1
    %v2595 = vmax.f32 %v2593, %v2594
    %v2596 = vsel %vm740, %v2576, -inf
    %v2597 = vrot.slane %v2596, 4
    %v2598 = vmax.f32 %v2596, %v2597
    %v2599 = vrot.slane %v2598, 2
    %v2600 = vmax.f32 %v2598, %v2599
    %v2601 = vrot.slane %v2600, 1
    %v2602 = vmax.f32 %v2600, %v2601
    %v2603 = vsel %vm740, %v2577, -inf
    %v2604 = vrot.slane %v2603, 4
    %v2605 = vmax.f32 %v2603, %v2604
    %v2606 = vrot.slane %v2605, 2
    %v2607 = vmax.f32 %v2605, %v2606
    %v2608 = vrot.slane %v2607, 1
    %v2609 = vmax.f32 %v2607, %v2608
    %v2610 = vsel %vm740, %v2578, -inf
    %v2611 = vrot.slane %v2610, 4
    %v2612 = vmax.f32 %v2610, %v2611
    %v2613 = vrot.slane %v2612, 2
    %v2614 = vmax.f32 %v2612, %v2613
    %v2615 = vrot.slane %v2614, 1
    %v2616 = vmax.f32 %v2614, %v2615
    %v2617 = vsel %vm740, %v2579, -inf
    %v2618 = vrot.slane %v2617, 4
    %v2619 = vmax.f32 %v2617, %v2618
    %v2620 = vrot.slane %v2619, 2
    %v2621 = vmax.f32 %v2619, %v2620
    %v2622 = vrot.slane %v2621, 1
    %v2623 = vmax.f32 %v2621, %v2622
    %v2624 = vsel %vm740, %v2580, -inf
    %v2625 = vrot.slane %v2624, 4
    %v2626 = vmax.f32 %v2624, %v2625
    %v2627 = vrot.slane %v2626, 2
    %v2628 = vmax.f32 %v2626, %v2627
    %v2629 = vrot.slane %v2628, 1
    %v2630 = vmax.f32 %v2628, %v2629
    %v2631 = vsel %vm740, %v2581, -inf
    %v2632 = vrot.slane %v2631, 4
    %v2633 = vmax.f32 %v2631, %v2632
    %v2634 = vrot.slane %v2633, 2
    %v2635 = vmax.f32 %v2633, %v2634
    %v2636 = vrot.slane %v2635, 1
    %v2637 = vmax.f32 %v2635, %v2636
    %v2638 = vsub.f32 %v2574, %v2588
    %v2639 = vsub.f32 %v2575, %v2595
    %v2640 = vsub.f32 %v2576, %v2602
    %v2641 = vsub.f32 %v2577, %v2609
    %v2642 = vsub.f32 %v2578, %v2616
    %v2643 = vsub.f32 %v2579, %v2623
    %v2644 = vsub.f32 %v2580, %v2630
    %v2645 = vsub.f32 %v2581, %v2637
    %v2646 = vmul.f32 %v2638, 1.442695
    %v2647 = vpow.pop %v2646
    %v2648 = vmul.f32 %v2639, 1.442695
    %v2649 = vpow.pop %v2648
    %v2650 = vmul.f32 %v2640, 1.442695
    %v2651 = vpow.pop %v2650
    %v2652 = vmul.f32 %v2641, 1.442695
    %v2653 = vpow.pop %v2652
    %v2654 = vmul.f32 %v2642, 1.442695
    %v2655 = vpow.pop %v2654
    %v2656 = vmul.f32 %v2643, 1.442695
    %v2657 = vpow.pop %v2656
    %v2658 = vmul.f32 %v2644, 1.442695
    %v2659 = vpow.pop %v2658
    %v2660 = vmul.f32 %v2645, 1.442695
    %v2661 = vpow.pop %v2660
    %v2662 = vmul.f32 %v2647, %v50
    %v2663 = vmul.f32 %v2649, %v51
    %v2664 = vmul.f32 %v2651, %v52
    %v2665 = vmul.f32 %v2653, %v53
    %v2666 = vmul.f32 %v2655, %v54
    %v2667 = vmul.f32 %v2657, %v55
    %v2668 = vmul.f32 %v2659, %v56
    %v2669 = vmul.f32 %v2661, %v57
    %v2670 = vsel %vm740, %v2662, 0.0
    %v2671 = vrot.slane %v2670, 4
    %v2672 = vadd.f32 %v2670, %v2671
    %v2673 = vrot.slane %v2672, 2
    %v2674 = vadd.f32 %v2672, %v2673
    %v2675 = vrot.slane %v2674, 1
    %v2676 = vadd.f32 %v2674, %v2675
    %v2677 = vsel %vm740, %v2663, 0.0
    %v2678 = vrot.slane %v2677, 4
    %v2679 = vadd.f32 %v2677, %v2678
    %v2680 = vrot.slane %v2679, 2
    %v2681 = vadd.f32 %v2679, %v2680
    %v2682 = vrot.slane %v2681, 1
    %v2683 = vadd.f32 %v2681, %v2682
    %v2684 = vsel %vm740, %v2664, 0.0
    %v2685 = vrot.slane %v2684, 4
    %v2686 = vadd.f32 %v2684, %v2685
    %v2687 = vrot.slane %v2686, 2
    %v2688 = vadd.f32 %v2686, %v2687
    %v2689 = vrot.slane %v2688, 1
    %v2690 = vadd.f32 %v2688, %v2689
    %v2691 = vsel %vm740, %v2665, 0.0
    %v2692 = vrot.slane %v2691, 4
    %v2693 = vadd.f32 %v2691, %v2692
    %v2694 = vrot.slane %v2693, 2
    %v2695 = vadd.f32 %v2693, %v2694
    %v2696 = vrot.slane %v2695, 1
    %v2697 = vadd.f32 %v2695, %v2696
    %v2698 = vsel %vm740, %v2666, 0.0
    %v2699 = vrot.slane %v2698, 4
    %v2700 = vadd.f32 %v2698, %v2699
    %v2701 = vrot.slane %v2700, 2
    %v2702 = vadd.f32 %v2700, %v2701
    %v2703 = vrot.slane %v2702, 1
    %v2704 = vadd.f32 %v2702, %v2703
    %v2705 = vsel %vm740, %v2667, 0.0
    %v2706 = vrot.slane %v2705, 4
    %v2707 = vadd.f32 %v2705, %v2706
    %v2708 = vrot.slane %v2707, 2
    %v2709 = vadd.f32 %v2707, %v2708
    %v2710 = vrot.slane %v2709, 1
    %v2711 = vadd.f32 %v2709, %v2710
    %v2712 = vsel %vm740, %v2668, 0.0
    %v2713 = vrot.slane %v2712, 4
    %v2714 = vadd.f32 %v2712, %v2713
    %v2715 = vrot.slane %v2714, 2
    %v2716 = vadd.f32 %v2714, %v2715
    %v2717 = vrot.slane %v2716, 1
    %v2718 = vadd.f32 %v2716, %v2717
    %v2719 = vsel %vm740, %v2669, 0.0
    %v2720 = vrot.slane %v2719, 4
    %v2721 = vadd.f32 %v2719, %v2720
    %v2722 = vrot.slane %v2721, 2
    %v2723 = vadd.f32 %v2721, %v2722
    %v2724 = vrot.slane %v2723, 1
    %v2725 = vadd.f32 %v2723, %v2724
    %v2726 = vadd.f32 %v2676, 1e-05
    %v2727 = vadd.f32 %v2683, 1e-05
    %v2728 = vadd.f32 %v2690, 1e-05
    %v2729 = vadd.f32 %v2697, 1e-05
    %v2730 = vadd.f32 %v2704, 1e-05
    %v2731 = vadd.f32 %v2711, 1e-05
    %v2732 = vadd.f32 %v2718, 1e-05
    %v2733 = vadd.f32 %v2725, 1e-05
    %v2734 = vrcp.pop %v2726
    %v2735 = vmul.f32 %v2662, %v2734
    %v2736 = vrcp.pop %v2727
    %v2737 = vmul.f32 %v2663, %v2736
    %v2738 = vrcp.pop %v2728
    %v2739 = vmul.f32 %v2664, %v2738
    %v2740 = vrcp.pop %v2729
    %v2741 = vmul.f32 %v2665, %v2740
    %v2742 = vrcp.pop %v2730
    %v2743 = vmul.f32 %v2666, %v2742
    %v2744 = vrcp.pop %v2731
    %v2745 = vmul.f32 %v2667, %v2744
    %v2746 = vrcp.pop %v2732
    %v2747 = vmul.f32 %v2668, %v2746
    %v2748 = vrcp.pop %v2733
    %v2749 = vmul.f32 %v2669, %v2748
    %v2750 = vmul.f32 %v50, %v2735
    %v2751 = vmul.f32 %v51, %v2737
    %v2752 = vmul.f32 %v52, %v2739
    %v2753 = vmul.f32 %v53, %v2741
    %v2754 = vmul.f32 %v54, %v2743
    %v2755 = vmul.f32 %v55, %v2745
    %v2756 = vmul.f32 %v56, %v2747
    %v2757 = vmul.f32 %v57, %v2749
    %2759 = vset.pattern.permute.xlu0 0
    %2760 = vperm.xlu0 %2759, %v2750
    %v2761 = vpop.permute.xlu0 %2760
    %2764 = vset.pattern.permute.xlu0 0
    %2765 = vperm.xlu0 %2764, %v2751
    %v2766 = vpop.permute.xlu0 %2765
    %2769 = vset.pattern.permute.xlu0 0
    %2770 = vperm.xlu0 %2769, %v2752
    %v2771 = vpop.permute.xlu0 %2770
    %2774 = vset.pattern.permute.xlu0 0
    %2775 = vperm.xlu0 %2774, %v2753
    %v2776 = vpop.permute.xlu0 %2775
    %2779 = vset.pattern.permute.xlu0 0
    %2780 = vperm.xlu0 %2779, %v2754
    %v2781 = vpop.permute.xlu0 %2780
    %2784 = vset.pattern.permute.xlu0 0
    %2785 = vperm.xlu0 %2784, %v2755
    %v2786 = vpop.permute.xlu0 %2785
    %2789 = vset.pattern.permute.xlu0 0
    %2790 = vperm.xlu0 %2789, %v2756
    %v2791 = vpop.permute.xlu0 %2790
    %2794 = vset.pattern.permute.xlu0 0
    %2795 = vperm.xlu0 %2794, %v2757
    %v2796 = vpop.permute.xlu0 %2795
    %v2798 = vmul.f32 %v42, %v2761
    %v2799 = vmul.f32 %v43, %v2766
    %v2800 = vmul.f32 %v44, %v2771
    %v2801 = vmul.f32 %v45, %v2776
    %v2802 = vmul.f32 %v46, %v2781
    %v2803 = vmul.f32 %v47, %v2786
    %v2804 = vmul.f32 %v48, %v2791
    %v2805 = vmul.f32 %v49, %v2796
    %v2806 = vsel %vm86, %v2798, 0.0
    %v2807 = vrot.slane %v2806, 4
    %v2808 = vadd.f32 %v2806, %v2807
    %v2809 = vrot.slane %v2808, 2
    %v2810 = vadd.f32 %v2808, %v2809
    %v2811 = vrot.slane %v2810, 1
    %v2812 = vadd.f32 %v2810, %v2811
    %v2813 = vsel %vm86, %v2799, 0.0
    %v2814 = vrot.slane %v2813, 4
    %v2815 = vadd.f32 %v2813, %v2814
    %v2816 = vrot.slane %v2815, 2
    %v2817 = vadd.f32 %v2815, %v2816
    %v2818 = vrot.slane %v2817, 1
    %v2819 = vadd.f32 %v2817, %v2818
    %v2820 = vsel %vm86, %v2800, 0.0
    %v2821 = vrot.slane %v2820, 4
    %v2822 = vadd.f32 %v2820, %v2821
    %v2823 = vrot.slane %v2822, 2
    %v2824 = vadd.f32 %v2822, %v2823
    %v2825 = vrot.slane %v2824, 1
    %v2826 = vadd.f32 %v2824, %v2825
    %v2827 = vsel %vm86, %v2801, 0.0
    %v2828 = vrot.slane %v2827, 4
    %v2829 = vadd.f32 %v2827, %v2828
    %v2830 = vrot.slane %v2829, 2
    %v2831 = vadd.f32 %v2829, %v2830
    %v2832 = vrot.slane %v2831, 1
    %v2833 = vadd.f32 %v2831, %v2832
    %v2834 = vsel %vm86, %v2802, 0.0
    %v2835 = vrot.slane %v2834, 4
    %v2836 = vadd.f32 %v2834, %v2835
    %v2837 = vrot.slane %v2836, 2
    %v2838 = vadd.f32 %v2836, %v2837
    %v2839 = vrot.slane %v2838, 1
    %v2840 = vadd.f32 %v2838, %v2839
    %v2841 = vsel %vm86, %v2803, 0.0
    %v2842 = vrot.slane %v2841, 4
    %v2843 = vadd.f32 %v2841, %v2842
    %v2844 = vrot.slane %v2843, 2
    %v2845 = vadd.f32 %v2843, %v2844
    %v2846 = vrot.slane %v2845, 1
    %v2847 = vadd.f32 %v2845, %v2846
    %v2848 = vsel %vm86, %v2804, 0.0
    %v2849 = vrot.slane %v2848, 4
    %v2850 = vadd.f32 %v2848, %v2849
    %v2851 = vrot.slane %v2850, 2
    %v2852 = vadd.f32 %v2850, %v2851
    %v2853 = vrot.slane %v2852, 1
    %v2854 = vadd.f32 %v2852, %v2853
    %v2855 = vsel %vm86, %v2805, 0.0
    %v2856 = vrot.slane %v2855, 4
    %v2857 = vadd.f32 %v2855, %v2856
    %v2858 = vrot.slane %v2857, 2
    %v2859 = vadd.f32 %v2857, %v2858
    %v2860 = vrot.slane %v2859, 1
    %v2861 = vadd.f32 %v2859, %v2860
    %v2870 = vsel %vm1029, %v2819, %v2812
    %v2871 = vsel %vm1031, %v2826, %v2870
    %v2872 = vsel %vm1033, %v2833, %v2871
    %v2873 = vsel %vm1035, %v2840, %v2872
    %v2874 = vsel %vm1037, %v2847, %v2873
    %v2875 = vsel %vm1039, %v2854, %v2874
    %v2876 = vsel %vm1041, %v2861, %v2875
    %v2878 = vadd.f32 %v2451, %v2876
    %2879 = vst.msk [vmem:[#allocation6] sm:$0xff] %vm86, %v2878
    // Predicated region
    $region34: #{tpu_custom_call.1} parent=1 // pred_check
      _
    $region35: #{tpu_custom_call.1} parent=1 // pred_check_branch
      %2881 = sbr.rel (0) target = $region37
    $region36: #{tpu_custom_call.1} parent=1 // pred_region
      %s2883 = ssub.s32 128, 128
      %2884 = vsyncadd [#allocation5], %s2883
      %s2886 = sshll.u32 [#allocation6], 4
      %s2887 = int_to_ptr.vmem [resolvable:$true] %s2886
      %2889 = dma.vmem_to_hbm [thread:$0]  %s2887, 128, %s7, [#allocation5]
    $region37: #{tpu_custom_call.1} parent=1 // pred_fallthru
      _
    // Predicated region
    $region38: #{tpu_custom_call.1} parent=1 // pred_check
      _
    $region39: #{tpu_custom_call.1} parent=1 // pred_check_branch
      %2891 = sbr.rel (0) target = $region41
    $region40: #{tpu_custom_call.1} parent=1 // pred_region
      %2892 = dma.done [#allocation5], 128
    $region41: #{tpu_custom_call.1} parent=1 // pred_fallthru
      _
    %2893 = vsyncpa [#allocation4], 1
    %2894 = vsyncpa [#allocation5], 1

</llo_original>
